<compile_context>
chip_gen: v6e
topology: v6e:2x2x1
jax: 0.10.0
libtpu: 0.0.40
codegen_flags: <defaults>
</compile_context>

<pallas_src>
import functools

import jax
import jax.numpy as jnp
from jax.experimental import pallas as pl
from jax.experimental.pallas import tpu as pltpu

LEAKY_SLOPE = 0.01          # nn.LeakyReLU default
BN_EPS = 1e-5               # nn.BatchNorm1d default
LANE = 128                  # channel dims padded to multiples of the lane width
TM_MAX = 8192               # upper bound on the M-tile


def _round_up(n, m):
    return (n + m - 1) // m * m


def _vmem_limit_bytes():
    """Per-generation VMEM budget: ~75% of the core's VMEM, capped at 100 MiB.

    v5e/v6e have 128 MiB VMEM per TensorCore -> ~96 MiB; v7x has 64 MiB ->
    ~48 MiB.  Falls back to the conservative v7x figure if the query fails.
    """
    cap = 64 * 1024 * 1024
    try:
        cap = int(getattr(pltpu.get_tpu_info(), "vmem_capacity_bytes", cap))
    except Exception:
        pass
    return max(16 * 1024 * 1024, min(cap * 3 // 4, 100 * 1024 * 1024))


def _use_bf16_elementwise():
    """bf16 VALU exists on v6e/v7x; keep pre-matmul elementwise math in f32 on
    older generations (v5e and earlier have no packed bf16 VALU)."""
    try:
        kind = jax.devices()[0].device_kind.lower()
    except Exception:
        return True
    return not any(tag in kind for tag in ("v2", "v3", "v4", "v5"))


def _pick_tile_m(m, c_max_p, vmem_limit):
    """Largest M-tile (multiple of 128) that fits the VMEM budget.

    Per-row VMEM ~= double-buffered bf16 in/out tiles + in-kernel f32/bf16
    temporaries ~= 20 bytes * padded channel width; keep 2x headroom for
    compiler temps.  Keep >= 2 tiles when there is enough work so the
    "parallel" grid axis can use both v7x TensorCores.
    """
    per_row = 20 * c_max_p + 256
    tm = (vmem_limit // 2) // per_row
    tm = max(LANE, min(TM_MAX, (tm // LANE) * LANE))
    if m >= 2048:
        tm = min(tm, _round_up((m + 1) // 2, LANE))
    return max(LANE, min(tm, _round_up(m, LANE)))


# ---------------------------------------------------------------------------
# Kernels
# ---------------------------------------------------------------------------
def _first_layer_kernel(mask_ref, x_ref, w_ref, h_ref, s_ref, ss_ref):
    # 1x1 conv as an MXU matmul (bf16 in, f32 accumulate).  The hidden-layer
    # conv bias is dropped: the following BN mean-subtraction cancels it.
    h = jnp.dot(x_ref[...], w_ref[...], preferred_element_type=jnp.float32)
    h_bf = h.astype(jnp.bfloat16)
    h_ref[...] = h_bf
    # BN partial stats (sum, sum of squares) as MXU column reductions.  The
    # (8, tm) LHS is the precomputed row-validity mask, so padded rows are
    # excluded with zero per-element VALU work and the mostly idle MXU does
    # the reduction instead of the VPU.  Stats use the same bf16-rounded h
    # that the next pass will normalize.
    lhs = mask_ref[...]
    s_ref[0] = jnp.dot(lhs, h_bf, preferred_element_type=jnp.float32)
    ss_ref[0] = jnp.dot(lhs, h_bf * h_bf, preferred_element_type=jnp.float32)


def _mid_layer_kernel(mask_ref, h_ref, scale_ref, shift_ref, w_ref,
                      hn_ref, s_ref, ss_ref, *, compute_dtype):
    # BN folded into one per-channel FMA + LeakyReLU, in `compute_dtype`
    # (bf16 on v6e/v7x: packed VALU, no extra cast before the MXU; f32 on v5e).
    a = (h_ref[...].astype(compute_dtype) * scale_ref[...].astype(compute_dtype)
         + shift_ref[...].astype(compute_dtype))
    a = jnp.maximum(a, LEAKY_SLOPE * a)            # LeakyReLU (slope < 1)
    hn = jnp.dot(a.astype(jnp.bfloat16), w_ref[...],
                 preferred_element_type=jnp.float32)
    hn_bf = hn.astype(jnp.bfloat16)
    hn_ref[...] = hn_bf
    lhs = mask_ref[...]
    s_ref[0] = jnp.dot(lhs, hn_bf, preferred_element_type=jnp.float32)
    ss_ref[0] = jnp.dot(lhs, hn_bf * hn_bf, preferred_element_type=jnp.float32)


def _last_layer_kernel(h_ref, scale_ref, shift_ref, w_ref, b_ref, y_ref, *,
                       compute_dtype):
    a = (h_ref[...].astype(compute_dtype) * scale_ref[...].astype(compute_dtype)
         + shift_ref[...].astype(compute_dtype))
    a = jnp.maximum(a, LEAKY_SLOPE * a)
    y = jnp.dot(a.astype(jnp.bfloat16), w_ref[...],
                preferred_element_type=jnp.float32)
    y_ref[...] = y + b_ref[...]


# ---------------------------------------------------------------------------
# pallas_call wrappers (one grid over M tiles per pass)
# ---------------------------------------------------------------------------
def _first_layer_call(mask8, x, w, tm, cparams):
    m_pad, c_prev = x.shape
    c_nxt = w.shape[1]
    grid_m = m_pad // tm
    return pl.pallas_call(
        _first_layer_kernel,
        out_shape=(jax.ShapeDtypeStruct((m_pad, c_nxt), jnp.bfloat16),
                   jax.ShapeDtypeStruct((grid_m, 8, c_nxt), jnp.float32),
                   jax.ShapeDtypeStruct((grid_m, 8, c_nxt), jnp.float32)),
        grid=(grid_m,),
        in_specs=[pl.BlockSpec((8, tm), lambda i: (0, i)),
                  pl.BlockSpec((tm, c_prev), lambda i: (i, 0)),
                  pl.BlockSpec((c_prev, c_nxt), lambda i: (0, 0))],
        out_specs=(pl.BlockSpec((tm, c_nxt), lambda i: (i, 0)),
                   pl.BlockSpec((1, 8, c_nxt), lambda i: (i, 0, 0)),
                   pl.BlockSpec((1, 8, c_nxt), lambda i: (i, 0, 0))),
        compiler_params=cparams,
    )(mask8, x, w)


def _mid_layer_call(mask8, h, scale, shift, w, tm, cparams, compute_dtype):
    m_pad, c_prev = h.shape
    c_nxt = w.shape[1]
    grid_m = m_pad // tm
    kernel = functools.partial(_mid_layer_kernel, compute_dtype=compute_dtype)
    return pl.pallas_call(
        kernel,
        out_shape=(jax.ShapeDtypeStruct((m_pad, c_nxt), jnp.bfloat16),
                   jax.ShapeDtypeStruct((grid_m, 8, c_nxt), jnp.float32),
                   jax.ShapeDtypeStruct((grid_m, 8, c_nxt), jnp.float32)),
        grid=(grid_m,),
        in_specs=[pl.BlockSpec((8, tm), lambda i: (0, i)),
                  pl.BlockSpec((tm, c_prev), lambda i: (i, 0)),
                  pl.BlockSpec((1, c_prev), lambda i: (0, 0)),
                  pl.BlockSpec((1, c_prev), lambda i: (0, 0)),
                  pl.BlockSpec((c_prev, c_nxt), lambda i: (0, 0))],
        out_specs=(pl.BlockSpec((tm, c_nxt), lambda i: (i, 0)),
                   pl.BlockSpec((1, 8, c_nxt), lambda i: (i, 0, 0)),
                   pl.BlockSpec((1, 8, c_nxt), lambda i: (i, 0, 0))),
        compiler_params=cparams,
    )(mask8, h, scale, shift, w)


def _last_layer_call(h, scale, shift, w, b, tm, cparams, compute_dtype):
    m_pad, c_prev = h.shape
    c_nxt = w.shape[1]
    grid_m = m_pad // tm
    kernel = functools.partial(_last_layer_kernel, compute_dtype=compute_dtype)
    return pl.pallas_call(
        kernel,
        out_shape=jax.ShapeDtypeStruct((m_pad, c_nxt), jnp.float32),
        grid=(grid_m,),
        in_specs=[pl.BlockSpec((tm, c_prev), lambda i: (i, 0)),
                  pl.BlockSpec((1, c_prev), lambda i: (0, 0)),
                  pl.BlockSpec((1, c_prev), lambda i: (0, 0)),
                  pl.BlockSpec((c_prev, c_nxt), lambda i: (0, 0)),
                  pl.BlockSpec((1, c_nxt), lambda i: (0, 0))],
        out_specs=pl.BlockSpec((tm, c_nxt), lambda i: (i, 0)),
        compiler_params=cparams,
    )(h, scale, shift, w, b)


def _bn_scale_shift(s_parts, ss_parts, gamma_p, beta_p, m_true, c_true):
    """Combine per-tile partial sums into folded BN scale/shift, each (1, Cp) f32.

    Single-pass E[x^2]-mean^2 variance (f32 accumulate); fine for BN-scale
    activations, but a Welford-style combine would be safer if |mean| >> std.
    """
    s = jnp.sum(s_parts[:, 0, :], axis=0)
    ss = jnp.sum(ss_parts[:, 0, :], axis=0)
    mean = s / m_true
    var = jnp.maximum(ss / m_true - mean * mean, 0.0)   # biased variance
    inv = jax.lax.rsqrt(var + BN_EPS)
    scale = gamma_p * inv
    shift = beta_p - mean * scale
    # Explicitly zero padded channels (gamma/beta are zero-padded already, but
    # don't rely on that to neutralize rsqrt(eps) on empty channels).
    valid = jnp.arange(scale.shape[0]) < c_true
    scale = jnp.where(valid, scale, 0.0)
    shift = jnp.where(valid, shift, 0.0)
    return (scale.reshape(1, -1).astype(jnp.float32),
            shift.reshape(1, -1).astype(jnp.float32))


# ---------------------------------------------------------------------------
# Host-side driver
# ---------------------------------------------------------------------------
def mlp_pallas(x, params, c_out, *, tile_m=None):
    """Run the fused/tiled MLP.

    x:      (..., c_in) float32
    params: flat list [W0, b0, g0, be0, ..., W_last, b_last]; Wi is (d_in, d_out)
            (already transposed for matmul), bi/gi/bei are (1, d_out).
    """
    input_shape = x.shape
    c_in = input_shape[-1]
    M = 1
    for s in input_shape[:-1]:
        M *= s
    num_hidden = (len(params) - 2) // 4
    assert num_hidden >= 1, "expects at least one hidden (conv->bn->act) block"

    widths = [c_in] + [params[4 * l].shape[1] for l in range(num_hidden)] + [c_out]
    widths_p = [_round_up(c, LANE) for c in widths]

    vmem_limit = _vmem_limit_bytes()
    tm = tile_m if tile_m is not None else _pick_tile_m(M, max(widths_p), vmem_limit)
    m_pad = _round_up(M, tm)
    cparams = pltpu.CompilerParams(
        dimension_semantics=("parallel",),      # M tiles independent -> megacore
        vmem_limit_bytes=int(vmem_limit),
    )
    compute_dtype = jnp.bfloat16 if _use_bf16_elementwise() else jnp.float32

    # Row-validity mask, folded into the LHS of the in-kernel stat matmuls
    # (all 8 rows identical; tiny DMA per tile, zero VALU cost).
    if m_pad == M:
        mask8 = jnp.ones((8, m_pad), jnp.bfloat16)
    else:
        valid = (jnp.arange(m_pad, dtype=jnp.int32) < M).astype(jnp.bfloat16)
        mask8 = jnp.broadcast_to(valid[None, :], (8, m_pad))

    # Input: cast to bf16 BEFORE padding so a padded f32 copy is never made;
    # skip padding entirely when shapes already match.
    c_in_p = widths_p[0]
    x2d = x.reshape(M, c_in).astype(jnp.bfloat16)
    if (m_pad, c_in_p) != (M, c_in):
        x2d = jnp.pad(x2d, ((0, m_pad - M), (0, c_in_p - c_in)))

    h = x2d
    d_prev_p = c_in_p
    scale = shift = None
    idx = 0
    for layer in range(num_hidden):
        w, _b, gamma, beta = params[idx:idx + 4]   # hidden conv bias cancelled by BN
        idx += 4
        d_out = w.shape[1]
        d_out_p = widths_p[layer + 1]
        w_p = jnp.pad(w, ((0, d_prev_p - w.shape[0]),
                          (0, d_out_p - d_out))).astype(jnp.bfloat16)
        g_p = jnp.pad(gamma.reshape(-1), (0, d_out_p - d_out))
        be_p = jnp.pad(beta.reshape(-1), (0, d_out_p - d_out))

        if layer == 0:
            h, s_p, ss_p = _first_layer_call(mask8, h, w_p, tm, cparams)
        else:
            h, s_p, ss_p = _mid_layer_call(mask8, h, scale, shift, w_p, tm,
                                           cparams, compute_dtype)
        scale, shift = _bn_scale_shift(s_p, ss_p, g_p, be_p, M, d_out)
        d_prev_p = d_out_p

    w, b = params[idx:idx + 2]
    c_out_p = widths_p[-1]
    w_p = jnp.pad(w, ((0, d_prev_p - w.shape[0]),
                      (0, c_out_p - c_out))).astype(jnp.bfloat16)
    b_p = jnp.pad(b.reshape(-1), (0, c_out_p - c_out)).astype(jnp.float32).reshape(1, -1)

    # Lane-dense padded f32 output + slice (unmasked stores); slice skipped
    # when no padding was needed.
    y = _last_layer_call(h, scale, shift, w_p, b_p, tm, cparams, compute_dtype)
    if (m_pad, c_out_p) != (M, c_out):
        y = y[:M, :c_out]
    return y.reshape(*input_shape[:-1], c_out)


# ---------------------------------------------------------------------------
# Parameter init + pure-JAX reference (training-mode BN forward, like PyTorch)
# ---------------------------------------------------------------------------
def init_mlp_params(key, c_in, c_out, c_hiddens):
    params = []
    d_in = c_in
    for d_out in c_hiddens:
        key, kw, kb, kg, kbe = jax.random.split(key, 5)
        w = jax.random.normal(kw, (d_in, d_out), jnp.float32) * (1.0 / jnp.sqrt(d_in))
        b = jax.random.normal(kb, (1, d_out), jnp.float32) * 0.05
        gamma = 1.0 + 0.1 * jax.random.normal(kg, (1, d_out), jnp.float32)
        beta = 0.05 * jax.random.normal(kbe, (1, d_out), jnp.float32)
        params += [w, b, gamma, beta]
        d_in = d_out
    key, kw, kb = jax.random.split(key, 3)
    w = jax.random.normal(kw, (d_in, c_out), jnp.float32) * (1.0 / jnp.sqrt(d_in))
    b = jax.random.normal(kb, (1, c_out), jnp.float32) * 0.05
    params += [w, b]
    return params


def mlp_reference(x, params, c_out):
    input_shape = x.shape
    c_in = input_shape[-1]
    M = x.size // c_in
    h = x.reshape(M, c_in).astype(jnp.float32)
    num_hidden = (len(params) - 2) // 4
    idx = 0
    for _ in range(num_hidden):
        w, b, g, be = params[idx:idx + 4]
        idx += 4
        h = h @ w + b
        mean = h.mean(axis=0, keepdims=True)
        var = ((h - mean) ** 2).mean(axis=0, keepdims=True)
        h = (h - mean) / jnp.sqrt(var + BN_EPS) * g + be
        h = jnp.where(h > 0, h, LEAKY_SLOPE * h)
    w, b = params[idx:idx + 2]
    y = h @ w + b
    return y.reshape(*input_shape[:-1], c_out)


if __name__ == "__main__":
    key = jax.random.PRNGKey(0)
    kx, kp = jax.random.split(key)

    # Small shapes consistent with the module's forward: x = (B, N, c_in).
    B, N, c_in = 2, 16, 8
    c_hiddens = (32, 32)
    c_out = 16

    x = jax.random.normal(kx, (B, N, c_in), jnp.float32)
    params = init_mlp_params(kp, c_in, c_out, c_hiddens)

    run = jax.jit(lambda xx, pp: mlp_pallas(xx, pp, c_out))
    y = run(x, params)
    jax.block_until_ready(y)

    y_ref = mlp_reference(x, params, c_out)
    assert y.shape == (B, N, c_out), y.shape
    max_err = float(jnp.max(jnp.abs(y - y_ref)))
    # bf16 activations, bf16 MXU matmuls, bf16-consistent BN stats / BN-apply
    # (all with f32 accumulation) vs a pure-f32 reference.
    assert max_err < 1e-1, max_err

    print("KERNEL_OK")
</pallas_src>

<mosaic_0001>
module attributes {stable_mosaic.version = 11 : i64} {
  func.func @_first_layer_kernel(%arg0: i32, %arg1: memref<8x128xbf16, #tpu.memory_space<vmem>>, %arg2: memref<128x128xbf16, #tpu.memory_space<vmem>>, %arg3: memref<128x128xbf16, #tpu.memory_space<vmem>>, %arg4: memref<128x128xbf16, #tpu.memory_space<vmem>>, %arg5: memref<1x8x128xf32, #tpu.memory_space<vmem>>, %arg6: memref<1x8x128xf32, #tpu.memory_space<vmem>>) attributes {dimension_semantics = [#tpu.dimension_semantics<parallel>], iteration_bounds = array<i64: 1>, scalar_prefetch = 0 : i64, scratch_operands = 0 : i64, tpu.core_type = #tpu.core_type<tc>, window_params = [{transform_indices = @transform_0, window_bounds = array<i64: 8, 128>}, {transform_indices = @transform_1, window_bounds = array<i64: 128, 128>}, {pipeline_mode = #tpu.pipeline_mode<synchronous>, transform_indices = @transform_2, window_bounds = array<i64: 128, 128>}, {transform_indices = @transform_3, window_bounds = array<i64: 128, 128>}, {transform_indices = @transform_4, window_bounds = array<i64: 1, 8, 128>}, {transform_indices = @transform_5, window_bounds = array<i64: 1, 8, 128>}]} {
    %c0 = arith.constant 0 : index
    %c0_0 = arith.constant 0 : index
    %0 = vector.load %arg2[%c0, %c0_0] : memref<128x128xbf16, #tpu.memory_space<vmem>>, vector<128x128xbf16>
    %c0_1 = arith.constant 0 : index
    %c0_2 = arith.constant 0 : index
    %1 = vector.load %arg3[%c0_1, %c0_2] : memref<128x128xbf16, #tpu.memory_space<vmem>>, vector<128x128xbf16>
    %cst = arith.constant dense<0.000000e+00> : vector<128x128xf32>
    %2 = tpu.matmul %0, %1, %cst {dimension_numbers = #tpu.dot_dimension_numbers<[1], [0], [0], [1], [0, 0, 1, 1], [], []>} : vector<128x128xbf16>, vector<128x128xbf16>, vector<128x128xf32> -> vector<128x128xf32>
    %3 = arith.truncf %2 : vector<128x128xf32> to vector<128x128xbf16>
    %c0_3 = arith.constant 0 : index
    %c0_4 = arith.constant 0 : index
    %4 = vector.load %arg4[%c0_3, %c0_4] : memref<128x128xbf16, #tpu.memory_space<vmem>>, vector<128x128xbf16>
    tpu.vector_store %arg4[%c0_3, %c0_4], %3 {strides = array<i32>} : memref<128x128xbf16, #tpu.memory_space<vmem>>, vector<128x128xbf16>,
    %c0_5 = arith.constant 0 : index
    %c0_6 = arith.constant 0 : index
    %5 = vector.load %arg1[%c0_5, %c0_6] : memref<8x128xbf16, #tpu.memory_space<vmem>>, vector<8x128xbf16>
    %cst_7 = arith.constant dense<0.000000e+00> : vector<8x128xf32>
    %6 = tpu.matmul %5, %3, %cst_7 {dimension_numbers = #tpu.dot_dimension_numbers<[1], [0], [0], [1], [0, 0, 1, 1], [], []>} : vector<8x128xbf16>, vector<128x128xbf16>, vector<8x128xf32> -> vector<8x128xf32>
    %c0_8 = arith.constant 0 : index
    %c0_9 = arith.constant 0 : index
    %c0_10 = arith.constant 0 : index
    %7 = vector.load %arg5[%c0_8, %c0_9, %c0_10] : memref<1x8x128xf32, #tpu.memory_space<vmem>>, vector<1x8x128xf32>
    %8 = vector.shape_cast %7 : vector<1x8x128xf32> to vector<8x128xf32>
    %9 = vector.shape_cast %6 : vector<8x128xf32> to vector<1x8x128xf32>
    tpu.vector_store %arg5[%c0_8, %c0_9, %c0_10], %9 {strides = array<i32>} : memref<1x8x128xf32, #tpu.memory_space<vmem>>, vector<1x8x128xf32>,
    %10 = arith.mulf %3, %3 : vector<128x128xbf16>
    %cst_11 = arith.constant dense<0.000000e+00> : vector<8x128xf32>
    %11 = tpu.matmul %5, %10, %cst_11 {dimension_numbers = #tpu.dot_dimension_numbers<[1], [0], [0], [1], [0, 0, 1, 1], [], []>} : vector<8x128xbf16>, vector<128x128xbf16>, vector<8x128xf32> -> vector<8x128xf32>
    %c0_12 = arith.constant 0 : index
    %c0_13 = arith.constant 0 : index
    %c0_14 = arith.constant 0 : index
    %12 = vector.load %arg6[%c0_12, %c0_13, %c0_14] : memref<1x8x128xf32, #tpu.memory_space<vmem>>, vector<1x8x128xf32>
    %13 = vector.shape_cast %12 : vector<1x8x128xf32> to vector<8x128xf32>
    %14 = vector.shape_cast %11 : vector<8x128xf32> to vector<1x8x128xf32>
    tpu.vector_store %arg6[%c0_12, %c0_13, %c0_14], %14 {strides = array<i32>} : memref<1x8x128xf32, #tpu.memory_space<vmem>>, vector<1x8x128xf32>,
    return
  }
  func.func @transform_0(%arg0: i32) -> (i32, i32) {
    %c0_i32 = arith.constant 0 : i32
    %c0_i32_0 = arith.constant 0 : i32
    return %c0_i32, %arg0 : i32, i32
  }
  func.func @transform_1(%arg0: i32) -> (i32, i32) {
    %c0_i32 = arith.constant 0 : i32
    %c0_i32_0 = arith.constant 0 : i32
    return %arg0, %c0_i32 : i32, i32
  }
  func.func @transform_2(%arg0: i32) -> (i32, i32) {
    %c0_i32 = arith.constant 0 : i32
    %c0_i32_0 = arith.constant 0 : i32
    %c0_i32_1 = arith.constant 0 : i32
    return %c0_i32, %c0_i32_0 : i32, i32
  }
  func.func @transform_3(%arg0: i32) -> (i32, i32) {
    %c0_i32 = arith.constant 0 : i32
    %c0_i32_0 = arith.constant 0 : i32
    return %arg0, %c0_i32 : i32, i32
  }
  func.func @transform_4(%arg0: i32) -> (i32, i32, i32) {
    %c0_i32 = arith.constant 0 : i32
    %c0_i32_0 = arith.constant 0 : i32
    %c0_i32_1 = arith.constant 0 : i32
    return %arg0, %c0_i32, %c0_i32_0 : i32, i32, i32
  }
  func.func @transform_5(%arg0: i32) -> (i32, i32, i32) {
    %c0_i32 = arith.constant 0 : i32
    %c0_i32_0 = arith.constant 0 : i32
    %c0_i32_1 = arith.constant 0 : i32
    return %arg0, %c0_i32, %c0_i32_0 : i32, i32, i32
  }
}

module attributes {stable_mosaic.version = 11 : i64} {
  func.func @_mid_layer_kernel(%arg0: i32, %arg1: memref<8x128xbf16, #tpu.memory_space<vmem>>, %arg2: memref<128x128xbf16, #tpu.memory_space<vmem>>, %arg3: memref<1x128xf32, #tpu.memory_space<vmem>>, %arg4: memref<1x128xf32, #tpu.memory_space<vmem>>, %arg5: memref<128x128xbf16, #tpu.memory_space<vmem>>, %arg6: memref<128x128xbf16, #tpu.memory_space<vmem>>, %arg7: memref<1x8x128xf32, #tpu.memory_space<vmem>>, %arg8: memref<1x8x128xf32, #tpu.memory_space<vmem>>) attributes {dimension_semantics = [#tpu.dimension_semantics<parallel>], iteration_bounds = array<i64: 1>, scalar_prefetch = 0 : i64, scratch_operands = 0 : i64, tpu.core_type = #tpu.core_type<tc>, window_params = [{transform_indices = @transform_0, window_bounds = array<i64: 8, 128>}, {transform_indices = @transform_1, window_bounds = array<i64: 128, 128>}, {pipeline_mode = #tpu.pipeline_mode<synchronous>, transform_indices = @transform_2, window_bounds = array<i64: 1, 128>}, {pipeline_mode = #tpu.pipeline_mode<synchronous>, transform_indices = @transform_3, window_bounds = array<i64: 1, 128>}, {pipeline_mode = #tpu.pipeline_mode<synchronous>, transform_indices = @transform_4, window_bounds = array<i64: 128, 128>}, {transform_indices = @transform_5, window_bounds = array<i64: 128, 128>}, {transform_indices = @transform_6, window_bounds = array<i64: 1, 8, 128>}, {transform_indices = @transform_7, window_bounds = array<i64: 1, 8, 128>}]} {
    %c0 = arith.constant 0 : index
    %c0_0 = arith.constant 0 : index
    %0 = vector.load %arg2[%c0, %c0_0] : memref<128x128xbf16, #tpu.memory_space<vmem>>, vector<128x128xbf16>
    %c0_1 = arith.constant 0 : index
    %c0_2 = arith.constant 0 : index
    %1 = vector.load %arg3[%c0_1, %c0_2] : memref<1x128xf32, #tpu.memory_space<vmem>>, vector<1x128xf32>
    %2 = arith.truncf %1 : vector<1x128xf32> to vector<1x128xbf16>
    %3 = vector.broadcast %2 : vector<1x128xbf16> to vector<128x128xbf16>
    %4 = arith.mulf %0, %3 : vector<128x128xbf16>
    %c0_3 = arith.constant 0 : index
    %c0_4 = arith.constant 0 : index
    %5 = vector.load %arg4[%c0_3, %c0_4] : memref<1x128xf32, #tpu.memory_space<vmem>>, vector<1x128xf32>
    %6 = arith.truncf %5 : vector<1x128xf32> to vector<1x128xbf16>
    %7 = vector.broadcast %6 : vector<1x128xbf16> to vector<128x128xbf16>
    %8 = arith.addf %4, %7 : vector<128x128xbf16>
    %cst = arith.constant 1.000980e-02 : bf16
    %9 = vector.broadcast %cst : bf16 to vector<128x128xbf16>
    %10 = arith.mulf %9, %8 : vector<128x128xbf16>
    %11 = arith.maximumf %8, %10 : vector<128x128xbf16>
    %c0_5 = arith.constant 0 : index
    %c0_6 = arith.constant 0 : index
    %12 = vector.load %arg5[%c0_5, %c0_6] : memref<128x128xbf16, #tpu.memory_space<vmem>>, vector<128x128xbf16>
    %cst_7 = arith.constant dense<0.000000e+00> : vector<128x128xf32>
    %13 = tpu.matmul %11, %12, %cst_7 {dimension_numbers = #tpu.dot_dimension_numbers<[1], [0], [0], [1], [0, 0, 1, 1], [], []>} : vector<128x128xbf16>, vector<128x128xbf16>, vector<128x128xf32> -> vector<128x128xf32>
    %14 = arith.truncf %13 : vector<128x128xf32> to vector<128x128xbf16>
    %c0_8 = arith.constant 0 : index
    %c0_9 = arith.constant 0 : index
    %15 = vector.load %arg6[%c0_8, %c0_9] : memref<128x128xbf16, #tpu.memory_space<vmem>>, vector<128x128xbf16>
    tpu.vector_store %arg6[%c0_8, %c0_9], %14 {strides = array<i32>} : memref<128x128xbf16, #tpu.memory_space<vmem>>, vector<128x128xbf16>,
    %c0_10 = arith.constant 0 : index
    %c0_11 = arith.constant 0 : index
    %16 = vector.load %arg1[%c0_10, %c0_11] : memref<8x128xbf16, #tpu.memory_space<vmem>>, vector<8x128xbf16>
    %cst_12 = arith.constant dense<0.000000e+00> : vector<8x128xf32>
    %17 = tpu.matmul %16, %14, %cst_12 {dimension_numbers = #tpu.dot_dimension_numbers<[1], [0], [0], [1], [0, 0, 1, 1], [], []>} : vector<8x128xbf16>, vector<128x128xbf16>, vector<8x128xf32> -> vector<8x128xf32>
    %c0_13 = arith.constant 0 : index
    %c0_14 = arith.constant 0 : index
    %c0_15 = arith.constant 0 : index
    %18 = vector.load %arg7[%c0_13, %c0_14, %c0_15] : memref<1x8x128xf32, #tpu.memory_space<vmem>>, vector<1x8x128xf32>
    %19 = vector.shape_cast %18 : vector<1x8x128xf32> to vector<8x128xf32>
    %20 = vector.shape_cast %17 : vector<8x128xf32> to vector<1x8x128xf32>
    tpu.vector_store %arg7[%c0_13, %c0_14, %c0_15], %20 {strides = array<i32>} : memref<1x8x128xf32, #tpu.memory_space<vmem>>, vector<1x8x128xf32>,
    %21 = arith.mulf %14, %14 : vector<128x128xbf16>
    %cst_16 = arith.constant dense<0.000000e+00> : vector<8x128xf32>
    %22 = tpu.matmul %16, %21, %cst_16 {dimension_numbers = #tpu.dot_dimension_numbers<[1], [0], [0], [1], [0, 0, 1, 1], [], []>} : vector<8x128xbf16>, vector<128x128xbf16>, vector<8x128xf32> -> vector<8x128xf32>
    %c0_17 = arith.constant 0 : index
    %c0_18 = arith.constant 0 : index
    %c0_19 = arith.constant 0 : index
    %23 = vector.load %arg8[%c0_17, %c0_18, %c0_19] : memref<1x8x128xf32, #tpu.memory_space<vmem>>, vector<1x8x128xf32>
    %24 = vector.shape_cast %23 : vector<1x8x128xf32> to vector<8x128xf32>
    %25 = vector.shape_cast %22 : vector<8x128xf32> to vector<1x8x128xf32>
    tpu.vector_store %arg8[%c0_17, %c0_18, %c0_19], %25 {strides = array<i32>} : memref<1x8x128xf32, #tpu.memory_space<vmem>>, vector<1x8x128xf32>,
    return
  }
  func.func @transform_0(%arg0: i32) -> (i32, i32) {
    %c0_i32 = arith.constant 0 : i32
    %c0_i32_0 = arith.constant 0 : i32
    return %c0_i32, %arg0 : i32, i32
  }
  func.func @transform_1(%arg0: i32) -> (i32, i32) {
    %c0_i32 = arith.constant 0 : i32
    %c0_i32_0 = arith.constant 0 : i32
    return %arg0, %c0_i32 : i32, i32
  }
  func.func @transform_2(%arg0: i32) -> (i32, i32) {
    %c0_i32 = arith.constant 0 : i32
    %c0_i32_0 = arith.constant 0 : i32
    %c0_i32_1 = arith.constant 0 : i32
    return %c0_i32, %c0_i32_0 : i32, i32
  }
  func.func @transform_3(%arg0: i32) -> (i32, i32) {
    %c0_i32 = arith.constant 0 : i32
    %c0_i32_0 = arith.constant 0 : i32
    %c0_i32_1 = arith.constant 0 : i32
    return %c0_i32, %c0_i32_0 : i32, i32
  }
  func.func @transform_4(%arg0: i32) -> (i32, i32) {
    %c0_i32 = arith.constant 0 : i32
    %c0_i32_0 = arith.constant 0 : i32
    %c0_i32_1 = arith.constant 0 : i32
    return %c0_i32, %c0_i32_0 : i32, i32
  }
  func.func @transform_5(%arg0: i32) -> (i32, i32) {
    %c0_i32 = arith.constant 0 : i32
    %c0_i32_0 = arith.constant 0 : i32
    return %arg0, %c0_i32 : i32, i32
  }
  func.func @transform_6(%arg0: i32) -> (i32, i32, i32) {
    %c0_i32 = arith.constant 0 : i32
    %c0_i32_0 = arith.constant 0 : i32
    %c0_i32_1 = arith.constant 0 : i32
    return %arg0, %c0_i32, %c0_i32_0 : i32, i32, i32
  }
  func.func @transform_7(%arg0: i32) -> (i32, i32, i32) {
    %c0_i32 = arith.constant 0 : i32
    %c0_i32_0 = arith.constant 0 : i32
    %c0_i32_1 = arith.constant 0 : i32
    return %arg0, %c0_i32, %c0_i32_0 : i32, i32, i32
  }
}

module attributes {stable_mosaic.version = 11 : i64} {
  func.func @_last_layer_kernel(%arg0: i32, %arg1: memref<128x128xbf16, #tpu.memory_space<vmem>>, %arg2: memref<1x128xf32, #tpu.memory_space<vmem>>, %arg3: memref<1x128xf32, #tpu.memory_space<vmem>>, %arg4: memref<128x128xbf16, #tpu.memory_space<vmem>>, %arg5: memref<1x128xf32, #tpu.memory_space<vmem>>, %arg6: memref<128x128xf32, #tpu.memory_space<vmem>>) attributes {dimension_semantics = [#tpu.dimension_semantics<parallel>], iteration_bounds = array<i64: 1>, scalar_prefetch = 0 : i64, scratch_operands = 0 : i64, tpu.core_type = #tpu.core_type<tc>, window_params = [{transform_indices = @transform_0, window_bounds = array<i64: 128, 128>}, {pipeline_mode = #tpu.pipeline_mode<synchronous>, transform_indices = @transform_1, window_bounds = array<i64: 1, 128>}, {pipeline_mode = #tpu.pipeline_mode<synchronous>, transform_indices = @transform_2, window_bounds = array<i64: 1, 128>}, {pipeline_mode = #tpu.pipeline_mode<synchronous>, transform_indices = @transform_3, window_bounds = array<i64: 128, 128>}, {pipeline_mode = #tpu.pipeline_mode<synchronous>, transform_indices = @transform_4, window_bounds = array<i64: 1, 128>}, {transform_indices = @transform_5, window_bounds = array<i64: 128, 128>}]} {
    %c0 = arith.constant 0 : index
    %c0_0 = arith.constant 0 : index
    %0 = vector.load %arg1[%c0, %c0_0] : memref<128x128xbf16, #tpu.memory_space<vmem>>, vector<128x128xbf16>
    %c0_1 = arith.constant 0 : index
    %c0_2 = arith.constant 0 : index
    %1 = vector.load %arg2[%c0_1, %c0_2] : memref<1x128xf32, #tpu.memory_space<vmem>>, vector<1x128xf32>
    %2 = arith.truncf %1 : vector<1x128xf32> to vector<1x128xbf16>
    %3 = vector.broadcast %2 : vector<1x128xbf16> to vector<128x128xbf16>
    %4 = arith.mulf %0, %3 : vector<128x128xbf16>
    %c0_3 = arith.constant 0 : index
    %c0_4 = arith.constant 0 : index
    %5 = vector.load %arg3[%c0_3, %c0_4] : memref<1x128xf32, #tpu.memory_space<vmem>>, vector<1x128xf32>
    %6 = arith.truncf %5 : vector<1x128xf32> to vector<1x128xbf16>
    %7 = vector.broadcast %6 : vector<1x128xbf16> to vector<128x128xbf16>
    %8 = arith.addf %4, %7 : vector<128x128xbf16>
    %cst = arith.constant 1.000980e-02 : bf16
    %9 = vector.broadcast %cst : bf16 to vector<128x128xbf16>
    %10 = arith.mulf %9, %8 : vector<128x128xbf16>
    %11 = arith.maximumf %8, %10 : vector<128x128xbf16>
    %c0_5 = arith.constant 0 : index
    %c0_6 = arith.constant 0 : index
    %12 = vector.load %arg4[%c0_5, %c0_6] : memref<128x128xbf16, #tpu.memory_space<vmem>>, vector<128x128xbf16>
    %cst_7 = arith.constant dense<0.000000e+00> : vector<128x128xf32>
    %13 = tpu.matmul %11, %12, %cst_7 {dimension_numbers = #tpu.dot_dimension_numbers<[1], [0], [0], [1], [0, 0, 1, 1], [], []>} : vector<128x128xbf16>, vector<128x128xbf16>, vector<128x128xf32> -> vector<128x128xf32>
    %c0_8 = arith.constant 0 : index
    %c0_9 = arith.constant 0 : index
    %14 = vector.load %arg5[%c0_8, %c0_9] : memref<1x128xf32, #tpu.memory_space<vmem>>, vector<1x128xf32>
    %15 = vector.broadcast %14 : vector<1x128xf32> to vector<128x128xf32>
    %16 = arith.addf %13, %15 : vector<128x128xf32>
    %c0_10 = arith.constant 0 : index
    %c0_11 = arith.constant 0 : index
    %17 = vector.load %arg6[%c0_10, %c0_11] : memref<128x128xf32, #tpu.memory_space<vmem>>, vector<128x128xf32>
    tpu.vector_store %arg6[%c0_10, %c0_11], %16 {strides = array<i32>} : memref<128x128xf32, #tpu.memory_space<vmem>>, vector<128x128xf32>,
    return
  }
  func.func @transform_0(%arg0: i32) -> (i32, i32) {
    %c0_i32 = arith.constant 0 : i32
    %c0_i32_0 = arith.constant 0 : i32
    return %arg0, %c0_i32 : i32, i32
  }
  func.func @transform_1(%arg0: i32) -> (i32, i32) {
    %c0_i32 = arith.constant 0 : i32
    %c0_i32_0 = arith.constant 0 : i32
    %c0_i32_1 = arith.constant 0 : i32
    return %c0_i32, %c0_i32_0 : i32, i32
  }
  func.func @transform_2(%arg0: i32) -> (i32, i32) {
    %c0_i32 = arith.constant 0 : i32
    %c0_i32_0 = arith.constant 0 : i32
    %c0_i32_1 = arith.constant 0 : i32
    return %c0_i32, %c0_i32_0 : i32, i32
  }
  func.func @transform_3(%arg0: i32) -> (i32, i32) {
    %c0_i32 = arith.constant 0 : i32
    %c0_i32_0 = arith.constant 0 : i32
    %c0_i32_1 = arith.constant 0 : i32
    return %c0_i32, %c0_i32_0 : i32, i32
  }
  func.func @transform_4(%arg0: i32) -> (i32, i32) {
    %c0_i32 = arith.constant 0 : i32
    %c0_i32_0 = arith.constant 0 : i32
    %c0_i32_1 = arith.constant 0 : i32
    return %c0_i32, %c0_i32_0 : i32, i32
  }
  func.func @transform_5(%arg0: i32) -> (i32, i32) {
    %c0_i32 = arith.constant 0 : i32
    %c0_i32_0 = arith.constant 0 : i32
    return %arg0, %c0_i32 : i32, i32
  }
}

</mosaic_0001>

<llo_original>
// kernel: _lambda_.4
$region0: #{_lambda_.4}
  #allocation0 [shape = 'u32[]', space=smem, size = 0x4, offset = 0x4, fixed_abs, tag = 'smem constant byte address 0x4 - core index']
  #allocation1 [shape = 'u32[144,128]{1,0:T(1,128)}', space=vmem, size = 0x12000, scoped, tag = 'internal scratch']
  %s0 = inlined_call_operand.vmem [shape: bf16[8,128], index: 0, kind: input, shape index: {}]
  %s1 = inlined_call_operand.vmem [shape: bf16[128,128], index: 1, kind: input, shape index: {}]
  %s2 = inlined_call_operand.vmem [shape: f32[1,128], index: 2, kind: input, shape index: {}]
  %s3 = inlined_call_operand.vmem [shape: f32[1,128], index: 3, kind: input, shape index: {}]
  %s4 = inlined_call_operand.vmem [shape: bf16[128,128], index: 4, kind: input, shape index: {}]
  %s5 = inlined_call_operand.vmem [shape: bf16[128,128], index: 5, kind: output, shape index: {0}]
  %s6 = inlined_call_operand.vmem [shape: f32[1,8,128], index: 6, kind: output, shape index: {1}]
  %s7 = inlined_call_operand.vmem [shape: f32[1,8,128], index: 7, kind: output, shape index: {2}]
  %8 = xla_tuple %s5, %s6, %s7
  %s9 = sld [smem:[#allocation0]]
  $region46: #{_lambda_.4} parent=0
    _
  %s11 = ssub.s32 1, %s9
  %s12 = scalar_select 0, %s11, %s9
  // Predicated region
  $region2: #{_lambda_.4} parent=0 // pred_check
    _
  $region3: #{_lambda_.4} parent=0 // pred_check_branch
    %14 = sbr.rel (0) target = $region5
  $region4: #{_lambda_.4} parent=0 // pred_region
    _
  $region5: #{_lambda_.4} parent=0 // pred_fallthru
    _
  // Predicated region
  $region6: #{_lambda_.4} parent=0 // pred_check
    _
  $region7: #{_lambda_.4} parent=0 // pred_check_branch
    %16 = sbr.rel (0) target = $region9
  $region8: #{_lambda_.4} parent=0 // pred_region
    _
  $region9: #{_lambda_.4} parent=0 // pred_fallthru
    _
  // Predicated region
  $region10: #{_lambda_.4} parent=0 // pred_check
    _
  $region11: #{_lambda_.4} parent=0 // pred_check_branch
    %18 = sbr.rel (0) target = $region13
  $region12: #{_lambda_.4} parent=0 // pred_region
    _
  $region13: #{_lambda_.4} parent=0 // pred_fallthru
    _
  // Predicated region
  $region14: #{_lambda_.4} parent=0 // pred_check
    _
  $region15: #{_lambda_.4} parent=0 // pred_check_branch
    %20 = sbr.rel (0) target = $region17
  $region16: #{_lambda_.4} parent=0 // pred_region
    _
  $region17: #{_lambda_.4} parent=0 // pred_fallthru
    _
  // Predicated region
  $region18: #{_lambda_.4} parent=0 // pred_check
    _
  $region19: #{_lambda_.4} parent=0 // pred_check_branch
    %22 = sbr.rel (0) target = $region21
  $region20: #{_lambda_.4} parent=0 // pred_region
    _
  $region21: #{_lambda_.4} parent=0 // pred_fallthru
    _
  %v25 = vld [vmem:[%s1] sm:$0xf]
  %v26 = vld [vmem:[%s1 + $0x4] sm:$0xf]
  %v27 = vld [vmem:[%s1 + $0x8] sm:$0xf]
  %v28 = vld [vmem:[%s1 + $0xc] sm:$0xf]
  %v29 = vld [vmem:[%s1 + $0x10] sm:$0xf]
  %v30 = vld [vmem:[%s1 + $0x14] sm:$0xf]
  %v31 = vld [vmem:[%s1 + $0x18] sm:$0xf]
  %v32 = vld [vmem:[%s1 + $0x1c] sm:$0xf]
  %v33 = vld [vmem:[%s1 + $0x20] sm:$0xf]
  %v34 = vld [vmem:[%s1 + $0x24] sm:$0xf]
  %v35 = vld [vmem:[%s1 + $0x28] sm:$0xf]
  %v36 = vld [vmem:[%s1 + $0x2c] sm:$0xf]
  %v37 = vld [vmem:[%s1 + $0x30] sm:$0xf]
  %v38 = vld [vmem:[%s1 + $0x34] sm:$0xf]
  %v39 = vld [vmem:[%s1 + $0x38] sm:$0xf]
  %v40 = vld [vmem:[%s1 + $0x3c] sm:$0xf]
  %v41 = vld [vmem:[%s2] sm:$0x1]
  %v42 = vpack.c.bf16 %v41, %v41
  %v44 = vpack.i.b16 %v42, %v42
  %v46 = vlaneseq
  %v47 = vshrl.u32 %v46, 7
  %v48 = vsub.s32 0, %v47
  %v49 = vrot.slane %v44, %v48
  %v51 = vunpack.c.l.b16 %v49
  %v52 = vpack.c.b16 %v51, %v51
  %v54 = vmul.bf16 %v25, %v52
  %v55 = vmul.bf16 %v26, %v52
  %v56 = vmul.bf16 %v27, %v52
  %v57 = vmul.bf16 %v28, %v52
  %v58 = vmul.bf16 %v29, %v52
  %v59 = vmul.bf16 %v30, %v52
  %v60 = vmul.bf16 %v31, %v52
  %v61 = vmul.bf16 %v32, %v52
  %v62 = vmul.bf16 %v33, %v52
  %v63 = vmul.bf16 %v34, %v52
  %v64 = vmul.bf16 %v35, %v52
  %v65 = vmul.bf16 %v36, %v52
  %v66 = vmul.bf16 %v37, %v52
  %v67 = vmul.bf16 %v38, %v52
  %v68 = vmul.bf16 %v39, %v52
  %v69 = vmul.bf16 %v40, %v52
  %v70 = vld [vmem:[%s3] sm:$0x1]
  %v71 = vpack.c.bf16 %v70, %v70
  %v73 = vpack.i.b16 %v71, %v71
  %v75 = vlaneseq
  %v76 = vshrl.u32 %v75, 7
  %v77 = vsub.s32 0, %v76
  %v78 = vrot.slane %v73, %v77
  %v80 = vunpack.c.l.b16 %v78
  %v81 = vpack.c.b16 %v80, %v80
  %v83 = vadd.bf16 %v54, %v81
  %v84 = vadd.bf16 %v55, %v81
  %v85 = vadd.bf16 %v56, %v81
  %v86 = vadd.bf16 %v57, %v81
  %v87 = vadd.bf16 %v58, %v81
  %v88 = vadd.bf16 %v59, %v81
  %v89 = vadd.bf16 %v60, %v81
  %v90 = vadd.bf16 %v61, %v81
  %v91 = vadd.bf16 %v62, %v81
  %v92 = vadd.bf16 %v63, %v81
  %v93 = vadd.bf16 %v64, %v81
  %v94 = vadd.bf16 %v65, %v81
  %v95 = vadd.bf16 %v66, %v81
  %v96 = vadd.bf16 %v67, %v81
  %v97 = vadd.bf16 %v68, %v81
  %v98 = vadd.bf16 %v69, %v81
  %v99 = vmul.bf16 %v83, 1009007652
  %v100 = vmul.bf16 %v84, 1009007652
  %v101 = vmul.bf16 %v85, 1009007652
  %v102 = vmul.bf16 %v86, 1009007652
  %v103 = vmul.bf16 %v87, 1009007652
  %v104 = vmul.bf16 %v88, 1009007652
  %v105 = vmul.bf16 %v89, 1009007652
  %v106 = vmul.bf16 %v90, 1009007652
  %v107 = vmul.bf16 %v91, 1009007652
  %v108 = vmul.bf16 %v92, 1009007652
  %v109 = vmul.bf16 %v93, 1009007652
  %v110 = vmul.bf16 %v94, 1009007652
  %v111 = vmul.bf16 %v95, 1009007652
  %v112 = vmul.bf16 %v96, 1009007652
  %v113 = vmul.bf16 %v97, 1009007652
  %v114 = vmul.bf16 %v98, 1009007652
  %v115 = vmax.bf16 %v83, %v99
  %v116 = vmax.bf16 %v84, %v100
  %v117 = vmax.bf16 %v85, %v101
  %v118 = vmax.bf16 %v86, %v102
  %v119 = vmax.bf16 %v87, %v103
  %v120 = vmax.bf16 %v88, %v104
  %v121 = vmax.bf16 %v89, %v105
  %v122 = vmax.bf16 %v90, %v106
  %v123 = vmax.bf16 %v91, %v107
  %v124 = vmax.bf16 %v92, %v108
  %v125 = vmax.bf16 %v93, %v109
  %v126 = vmax.bf16 %v94, %v110
  %v127 = vmax.bf16 %v95, %v111
  %v128 = vmax.bf16 %v96, %v112
  %v129 = vmax.bf16 %v97, %v113
  %v130 = vmax.bf16 %v98, %v114
  %v131 = vld [vmem:[%s4] sm:$0xf]
  %v132 = vld [vmem:[%s4 + $0x4] sm:$0xf]
  %v133 = vld [vmem:[%s4 + $0x8] sm:$0xf]
  %v134 = vld [vmem:[%s4 + $0xc] sm:$0xf]
  %v135 = vld [vmem:[%s4 + $0x10] sm:$0xf]
  %v136 = vld [vmem:[%s4 + $0x14] sm:$0xf]
  %v137 = vld [vmem:[%s4 + $0x18] sm:$0xf]
  %v138 = vld [vmem:[%s4 + $0x1c] sm:$0xf]
  %v139 = vld [vmem:[%s4 + $0x20] sm:$0xf]
  %v140 = vld [vmem:[%s4 + $0x24] sm:$0xf]
  %v141 = vld [vmem:[%s4 + $0x28] sm:$0xf]
  %v142 = vld [vmem:[%s4 + $0x2c] sm:$0xf]
  %v143 = vld [vmem:[%s4 + $0x30] sm:$0xf]
  %v144 = vld [vmem:[%s4 + $0x34] sm:$0xf]
  %v145 = vld [vmem:[%s4 + $0x38] sm:$0xf]
  %v146 = vld [vmem:[%s4 + $0x3c] sm:$0xf]
  %v163 = vunpack.c.l.b16 %v115
  %v164 = vunpack.c.l.b16 %v116
  %v165 = vunpack.c.l.b16 %v117
  %v166 = vunpack.c.l.b16 %v118
  %v167 = vunpack.c.l.b16 %v119
  %v168 = vunpack.c.l.b16 %v120
  %v169 = vunpack.c.l.b16 %v121
  %v170 = vunpack.c.l.b16 %v122
  %v171 = vunpack.c.l.b16 %v123
  %v172 = vunpack.c.l.b16 %v124
  %v173 = vunpack.c.l.b16 %v125
  %v174 = vunpack.c.l.b16 %v126
  %v175 = vunpack.c.l.b16 %v127
  %v176 = vunpack.c.l.b16 %v128
  %v177 = vunpack.c.l.b16 %v129
  %v178 = vunpack.c.l.b16 %v130
  %v179 = vpack.c.b16 %v164, %v163
  %v180 = vpack.c.b16 %v166, %v165
  %v181 = vpack.c.b16 %v168, %v167
  %v182 = vpack.c.b16 %v170, %v169
  %v183 = vpack.c.b16 %v172, %v171
  %v184 = vpack.c.b16 %v174, %v173
  %v185 = vpack.c.b16 %v176, %v175
  %v186 = vpack.c.b16 %v178, %v177
  %v211 = vunpack.c.l.b16 %v131
  %v212 = vunpack.c.l.b16 %v132
  %v213 = vunpack.c.l.b16 %v133
  %v214 = vunpack.c.l.b16 %v134
  %v215 = vunpack.c.l.b16 %v135
  %v216 = vunpack.c.l.b16 %v136
  %v217 = vunpack.c.l.b16 %v137
  %v218 = vunpack.c.l.b16 %v138
  %v219 = vunpack.c.l.b16 %v139
  %v220 = vunpack.c.l.b16 %v140
  %v221 = vunpack.c.l.b16 %v141
  %v222 = vunpack.c.l.b16 %v142
  %v223 = vunpack.c.l.b16 %v143
  %v224 = vunpack.c.l.b16 %v144
  %v225 = vunpack.c.l.b16 %v145
  %v226 = vunpack.c.l.b16 %v146
  %v227 = vpack.c.b16 %v212, %v211
  %v228 = vpack.c.b16 %v214, %v213
  %v229 = vpack.c.b16 %v216, %v215
  %v230 = vpack.c.b16 %v218, %v217
  %v231 = vpack.c.b16 %v220, %v219
  %v232 = vpack.c.b16 %v222, %v221
  %v233 = vpack.c.b16 %v224, %v223
  %v234 = vpack.c.b16 %v226, %v225
  %243 = vmatprep.subr.bf16.mxu0 0
  %244 = vmatpush1.bf16.msra.mxu0 %v234
  %245 = vmatprep.subr.bf16.mxu0 0
  %246 = vmatpush1.bf16.msra.mxu0 %v233
  %247 = vmatprep.subr.bf16.mxu0 0
  %248 = vmatpush1.bf16.msra.mxu0 %v232
  %249 = vmatprep.subr.bf16.mxu0 0
  %250 = vmatpush1.bf16.msra.mxu0 %v231
  %251 = vmatprep.subr.bf16.mxu0 0
  %252 = vmatpush1.bf16.msra.mxu0 %v230
  %253 = vmatprep.subr.bf16.mxu0 0
  %254 = vmatpush1.bf16.msra.mxu0 %v229
  %255 = vmatprep.subr.bf16.mxu0 0
  %256 = vmatpush1.bf16.msra.mxu0 %v228
  %257 = vmatprep.subr.bf16.mxu0 0
  %258 = vmatpush1.bf16.msra.mxu0 %v227
  %259 = vmatprep.subr.bf16.mxu0 0
  %260 = vmatpush2.bf16.msra.mxu0 0
  %261 = vmatprep.subr.bf16.mxu0 0
  %262 = vmatpush2.bf16.msra.mxu0 0
  %263 = vmatprep.subr.bf16.mxu0 0
  %264 = vmatpush2.bf16.msra.mxu0 0
  %265 = vmatprep.subr.bf16.mxu0 0
  %266 = vmatpush2.bf16.msra.mxu0 0
  %267 = vmatprep.subr.bf16.mxu0 0
  %268 = vmatpush2.bf16.msra.mxu0 0
  %269 = vmatprep.subr.bf16.mxu0 0
  %270 = vmatpush2.bf16.msra.mxu0 0
  %271 = vmatprep.subr.bf16.mxu0 0
  %272 = vmatpush2.bf16.msra.mxu0 0
  %273 = vmatprep.subr.bf16.mxu0 0
  %274 = vmatpush2.bf16.msra.mxu0 0
  %275 = vmatprep.mubr.bf16.mxu0 0
  %276 = vmatmul.mubr.bf16.gmra.mxu0 %v179
  %v277 = vpop.f32.mrf.mxu0
  %v278 = vadd.f32 0.0, %v277
  %v279 = vpop.f32.mrf.mxu0
  %v280 = vpop.f32.mrf.mxu0
  %v281 = vadd.f32 0.0, %v280
  %v282 = vpop.f32.mrf.mxu0
  %283 = vmatprep.mubr.bf16.mxu0 0
  %284 = vmatmul.mubr.bf16.gmra.mxu0 %v180
  %v285 = vpop.f32.mrf.mxu0
  %v286 = vadd.f32 0.0, %v285
  %v287 = vpop.f32.mrf.mxu0
  %v288 = vpop.f32.mrf.mxu0
  %v289 = vadd.f32 0.0, %v288
  %v290 = vpop.f32.mrf.mxu0
  %291 = vmatprep.mubr.bf16.mxu0 0
  %292 = vmatmul.mubr.bf16.gmra.mxu0 %v181
  %v293 = vpop.f32.mrf.mxu0
  %v294 = vadd.f32 0.0, %v293
  %v295 = vpop.f32.mrf.mxu0
  %v296 = vpop.f32.mrf.mxu0
  %v297 = vadd.f32 0.0, %v296
  %v298 = vpop.f32.mrf.mxu0
  %299 = vmatprep.mubr.bf16.mxu0 0
  %300 = vmatmul.mubr.bf16.gmra.mxu0 %v182
  %v301 = vpop.f32.mrf.mxu0
  %v302 = vadd.f32 0.0, %v301
  %v303 = vpop.f32.mrf.mxu0
  %v304 = vpop.f32.mrf.mxu0
  %v305 = vadd.f32 0.0, %v304
  %v306 = vpop.f32.mrf.mxu0
  %307 = vmatprep.mubr.bf16.mxu0 0
  %308 = vmatmul.mubr.bf16.gmra.mxu0 %v183
  %v309 = vpop.f32.mrf.mxu0
  %v310 = vadd.f32 0.0, %v309
  %v311 = vpop.f32.mrf.mxu0
  %v312 = vpop.f32.mrf.mxu0
  %v313 = vadd.f32 0.0, %v312
  %v314 = vpop.f32.mrf.mxu0
  %315 = vmatprep.mubr.bf16.mxu0 0
  %316 = vmatmul.mubr.bf16.gmra.mxu0 %v184
  %v317 = vpop.f32.mrf.mxu0
  %v318 = vadd.f32 0.0, %v317
  %v319 = vpop.f32.mrf.mxu0
  %v320 = vpop.f32.mrf.mxu0
  %v321 = vadd.f32 0.0, %v320
  %v322 = vpop.f32.mrf.mxu0
  %323 = vmatprep.mubr.bf16.mxu0 0
  %324 = vmatmul.mubr.bf16.gmra.mxu0 %v185
  %v325 = vpop.f32.mrf.mxu0
  %v326 = vadd.f32 0.0, %v325
  %v327 = vpop.f32.mrf.mxu0
  %v328 = vpop.f32.mrf.mxu0
  %v329 = vadd.f32 0.0, %v328
  %v330 = vpop.f32.mrf.mxu0
  %331 = vmatprep.mubr.bf16.mxu0 0
  %332 = vmatmul.mubr.bf16.gmra.mxu0 %v186
  %v333 = vpop.f32.mrf.mxu0
  %v334 = vadd.f32 0.0, %v333
  %v335 = vpop.f32.mrf.mxu0
  %v336 = vpop.f32.mrf.mxu0
  %v337 = vadd.f32 0.0, %v336
  %v338 = vpop.f32.mrf.mxu0
  %339 = vdwg.mxu0
  %v340 = vpack.c.bf16 %v281, %v278
  %v341 = vpack.c.bf16 %v289, %v286
  %v342 = vpack.c.bf16 %v297, %v294
  %v343 = vpack.c.bf16 %v305, %v302
  %v344 = vpack.c.bf16 %v313, %v310
  %v345 = vpack.c.bf16 %v321, %v318
  %v346 = vpack.c.bf16 %v329, %v326
  %v347 = vpack.c.bf16 %v337, %v334
  %v356 = vunpack.c.l.b16 %v340
  %v357 = vunpack.c.h.b16 %v340
  %v358 = vunpack.c.l.b16 %v341
  %v359 = vunpack.c.h.b16 %v341
  %v360 = vunpack.c.l.b16 %v342
  %v361 = vunpack.c.h.b16 %v342
  %v362 = vunpack.c.l.b16 %v343
  %v363 = vunpack.c.h.b16 %v343
  %v364 = vunpack.c.l.b16 %v344
  %v365 = vunpack.c.h.b16 %v344
  %v366 = vunpack.c.l.b16 %v345
  %v367 = vunpack.c.h.b16 %v345
  %v368 = vunpack.c.l.b16 %v346
  %v369 = vunpack.c.h.b16 %v346
  %v370 = vunpack.c.l.b16 %v347
  %v371 = vunpack.c.h.b16 %v347
  %v372 = vpack.c.b16 %v356, %v356
  %v373 = vpack.c.b16 %v357, %v357
  %v374 = vpack.c.b16 %v358, %v358
  %v375 = vpack.c.b16 %v359, %v359
  %v376 = vpack.c.b16 %v360, %v360
  %v377 = vpack.c.b16 %v361, %v361
  %v378 = vpack.c.b16 %v362, %v362
  %v379 = vpack.c.b16 %v363, %v363
  %v380 = vpack.c.b16 %v364, %v364
  %v381 = vpack.c.b16 %v365, %v365
  %v382 = vpack.c.b16 %v366, %v366
  %v383 = vpack.c.b16 %v367, %v367
  %v384 = vpack.c.b16 %v368, %v368
  %v385 = vpack.c.b16 %v369, %v369
  %v386 = vpack.c.b16 %v370, %v370
  %v387 = vpack.c.b16 %v371, %v371
  %404 = vst [vmem:[%s5] sm:$0xf] %v372
  %405 = vst [vmem:[%s5 + $0x4] sm:$0xf] %v373
  %406 = vst [vmem:[%s5 + $0x8] sm:$0xf] %v374
  %407 = vst [vmem:[%s5 + $0xc] sm:$0xf] %v375
  %408 = vst [vmem:[%s5 + $0x10] sm:$0xf] %v376
  %409 = vst [vmem:[%s5 + $0x14] sm:$0xf] %v377
  %410 = vst [vmem:[%s5 + $0x18] sm:$0xf] %v378
  %411 = vst [vmem:[%s5 + $0x1c] sm:$0xf] %v379
  %412 = vst [vmem:[%s5 + $0x20] sm:$0xf] %v380
  %413 = vst [vmem:[%s5 + $0x24] sm:$0xf] %v381
  %414 = vst [vmem:[%s5 + $0x28] sm:$0xf] %v382
  %415 = vst [vmem:[%s5 + $0x2c] sm:$0xf] %v383
  %416 = vst [vmem:[%s5 + $0x30] sm:$0xf] %v384
  %417 = vst [vmem:[%s5 + $0x34] sm:$0xf] %v385
  %418 = vst [vmem:[%s5 + $0x38] sm:$0xf] %v386
  %419 = vst [vmem:[%s5 + $0x3c] sm:$0xf] %v387
  %v420 = vld [vmem:[%s0] sm:$0xf]
  %421 = vmatprep.subr.bf16.mxu0 0
  %422 = vmatpush1.bf16.msra.mxu0 %v347
  %423 = vmatprep.subr.bf16.mxu0 0
  %424 = vmatpush1.bf16.msra.mxu0 %v346
  %425 = vmatprep.subr.bf16.mxu0 0
  %426 = vmatpush1.bf16.msra.mxu0 %v345
  %427 = vmatprep.subr.bf16.mxu0 0
  %428 = vmatpush1.bf16.msra.mxu0 %v344
  %429 = vmatprep.subr.bf16.mxu0 0
  %430 = vmatpush1.bf16.msra.mxu0 %v343
  %431 = vmatprep.subr.bf16.mxu0 0
  %432 = vmatpush1.bf16.msra.mxu0 %v342
  %433 = vmatprep.subr.bf16.mxu0 0
  %434 = vmatpush1.bf16.msra.mxu0 %v341
  %435 = vmatprep.subr.bf16.mxu0 0
  %436 = vmatpush1.bf16.msra.mxu0 %v340
  %437 = vmatprep.subr.bf16.mxu0 0
  %438 = vmatpush2.bf16.msra.mxu0 0
  %439 = vmatprep.subr.bf16.mxu0 0
  %440 = vmatpush2.bf16.msra.mxu0 0
  %441 = vmatprep.subr.bf16.mxu0 0
  %442 = vmatpush2.bf16.msra.mxu0 0
  %443 = vmatprep.subr.bf16.mxu0 0
  %444 = vmatpush2.bf16.msra.mxu0 0
  %445 = vmatprep.subr.bf16.mxu0 0
  %446 = vmatpush2.bf16.msra.mxu0 0
  %447 = vmatprep.subr.bf16.mxu0 0
  %448 = vmatpush2.bf16.msra.mxu0 0
  %449 = vmatprep.subr.bf16.mxu0 0
  %450 = vmatpush2.bf16.msra.mxu0 0
  %451 = vmatprep.subr.bf16.mxu0 0
  %452 = vmatpush2.bf16.msra.mxu0 0
  %453 = vmatprep.mubr.bf16.mxu0 0
  %454 = vmatmul.mubr.bf16.gmra.mxu0 %v420
  %v455 = vpop.f32.mrf.mxu0
  %v456 = vadd.f32 0.0, %v455
  %v457 = vpop.f32.mrf.mxu0
  %v458 = vpop.f32.mrf.mxu0
  %v459 = vpop.f32.mrf.mxu0
  %460 = vdwg.mxu0
  %461 = vst [vmem:[%s6] sm:$0xff] %v456
  %v462 = vmul.bf16 %v340, %v340
  %v463 = vmul.bf16 %v341, %v341
  %v464 = vmul.bf16 %v342, %v342
  %v465 = vmul.bf16 %v343, %v343
  %v466 = vmul.bf16 %v344, %v344
  %v467 = vmul.bf16 %v345, %v345
  %v468 = vmul.bf16 %v346, %v346
  %v469 = vmul.bf16 %v347, %v347
  %470 = vmatprep.subr.bf16.mxu0 0
  %471 = vmatpush1.bf16.msra.mxu0 %v469
  %472 = vmatprep.subr.bf16.mxu0 0
  %473 = vmatpush1.bf16.msra.mxu0 %v468
  %474 = vmatprep.subr.bf16.mxu0 0
  %475 = vmatpush1.bf16.msra.mxu0 %v467
  %476 = vmatprep.subr.bf16.mxu0 0
  %477 = vmatpush1.bf16.msra.mxu0 %v466
  %478 = vmatprep.subr.bf16.mxu0 0
  %479 = vmatpush1.bf16.msra.mxu0 %v465
  %480 = vmatprep.subr.bf16.mxu0 0
  %481 = vmatpush1.bf16.msra.mxu0 %v464
  %482 = vmatprep.subr.bf16.mxu0 0
  %483 = vmatpush1.bf16.msra.mxu0 %v463
  %484 = vmatprep.subr.bf16.mxu0 0
  %485 = vmatpush1.bf16.msra.mxu0 %v462
  %486 = vmatprep.subr.bf16.mxu0 0
  %487 = vmatpush2.bf16.msra.mxu0 0
  %488 = vmatprep.subr.bf16.mxu0 0
  %489 = vmatpush2.bf16.msra.mxu0 0
  %490 = vmatprep.subr.bf16.mxu0 0
  %491 = vmatpush2.bf16.msra.mxu0 0
  %492 = vmatprep.subr.bf16.mxu0 0
  %493 = vmatpush2.bf16.msra.mxu0 0
  %494 = vmatprep.subr.bf16.mxu0 0
  %495 = vmatpush2.bf16.msra.mxu0 0
  %496 = vmatprep.subr.bf16.mxu0 0
  %497 = vmatpush2.bf16.msra.mxu0 0
  %498 = vmatprep.subr.bf16.mxu0 0
  %499 = vmatpush2.bf16.msra.mxu0 0
  %500 = vmatprep.subr.bf16.mxu0 0
  %501 = vmatpush2.bf16.msra.mxu0 0
  %502 = vmatprep.mubr.bf16.mxu0 0
  %503 = vmatmul.mubr.bf16.gmra.mxu0 %v420
  %v504 = vpop.f32.mrf.mxu0
  %v505 = vadd.f32 0.0, %v504
  %v506 = vpop.f32.mrf.mxu0
  %v507 = vpop.f32.mrf.mxu0
  %v508 = vpop.f32.mrf.mxu0
  %509 = vdwg.mxu0
  %510 = vst [vmem:[%s7] sm:$0xff] %v505
  // Predicated region
  $region22: #{_lambda_.4} parent=0 // pred_check
    _
  $region23: #{_lambda_.4} parent=0 // pred_check_branch
    %512 = sbr.rel (0) target = $region25
  $region24: #{_lambda_.4} parent=0 // pred_region
    _
  $region25: #{_lambda_.4} parent=0 // pred_fallthru
    _
  // Predicated region
  $region26: #{_lambda_.4} parent=0 // pred_check
    _
  $region27: #{_lambda_.4} parent=0 // pred_check_branch
    %514 = sbr.rel (0) target = $region29
  $region28: #{_lambda_.4} parent=0 // pred_region
    _
  $region29: #{_lambda_.4} parent=0 // pred_fallthru
    _
  // Predicated region
  $region30: #{_lambda_.4} parent=0 // pred_check
    _
  $region31: #{_lambda_.4} parent=0 // pred_check_branch
    %516 = sbr.rel (0) target = $region33
  $region32: #{_lambda_.4} parent=0 // pred_region
    _
  $region33: #{_lambda_.4} parent=0 // pred_fallthru
    _
  // Predicated region
  $region34: #{_lambda_.4} parent=0 // pred_check
    _
  $region35: #{_lambda_.4} parent=0 // pred_check_branch
    %518 = sbr.rel (0) target = $region37
  $region36: #{_lambda_.4} parent=0 // pred_region
    _
  $region37: #{_lambda_.4} parent=0 // pred_fallthru
    _
  // Predicated region
  $region38: #{_lambda_.4} parent=0 // pred_check
    _
  $region39: #{_lambda_.4} parent=0 // pred_check_branch
    %520 = sbr.rel (0) target = $region41
  $region40: #{_lambda_.4} parent=0 // pred_region
    _
  $region41: #{_lambda_.4} parent=0 // pred_fallthru
    _
  // Predicated region
  $region42: #{_lambda_.4} parent=0 // pred_check
    _
  $region43: #{_lambda_.4} parent=0 // pred_check_branch
    %522 = sbr.rel (0) target = $region45
  $region44: #{_lambda_.4} parent=0 // pred_region
    _
  $region45: #{_lambda_.4} parent=0 // pred_fallthru
    _

// kernel: _lambda_.3
$region0: #{_lambda_.3}
  #allocation0 [shape = 'u32[]', space=smem, size = 0x4, offset = 0x4, fixed_abs, tag = 'smem constant byte address 0x4 - core index']
  #allocation1 [shape = 'u32[144,128]{1,0:T(1,128)}', space=vmem, size = 0x12000, scoped, tag = 'internal scratch']
  %s0 = inlined_call_operand.vmem [shape: bf16[8,128], index: 0, kind: input, shape index: {}]
  %s1 = inlined_call_operand.vmem [shape: bf16[128,128], index: 1, kind: input, shape index: {}]
  %s2 = inlined_call_operand.vmem [shape: bf16[128,128], index: 2, kind: input, shape index: {}]
  %s3 = inlined_call_operand.vmem [shape: bf16[128,128], index: 3, kind: output, shape index: {0}]
  %s4 = inlined_call_operand.vmem [shape: f32[1,8,128], index: 4, kind: output, shape index: {1}]
  %s5 = inlined_call_operand.vmem [shape: f32[1,8,128], index: 5, kind: output, shape index: {2}]
  %6 = xla_tuple %s3, %s4, %s5
  %s7 = sld [smem:[#allocation0]]
  $region38: #{_lambda_.3} parent=0
    _
  %s9 = ssub.s32 1, %s7
  %s10 = scalar_select 0, %s9, %s7
  // Predicated region
  $region2: #{_lambda_.3} parent=0 // pred_check
    _
  $region3: #{_lambda_.3} parent=0 // pred_check_branch
    %12 = sbr.rel (0) target = $region5
  $region4: #{_lambda_.3} parent=0 // pred_region
    _
  $region5: #{_lambda_.3} parent=0 // pred_fallthru
    _
  // Predicated region
  $region6: #{_lambda_.3} parent=0 // pred_check
    _
  $region7: #{_lambda_.3} parent=0 // pred_check_branch
    %14 = sbr.rel (0) target = $region9
  $region8: #{_lambda_.3} parent=0 // pred_region
    _
  $region9: #{_lambda_.3} parent=0 // pred_fallthru
    _
  // Predicated region
  $region10: #{_lambda_.3} parent=0 // pred_check
    _
  $region11: #{_lambda_.3} parent=0 // pred_check_branch
    %16 = sbr.rel (0) target = $region13
  $region12: #{_lambda_.3} parent=0 // pred_region
    _
  $region13: #{_lambda_.3} parent=0 // pred_fallthru
    _
  %v18 = vld [vmem:[%s1] sm:$0xf]
  %v19 = vld [vmem:[%s1 + $0x4] sm:$0xf]
  %v20 = vld [vmem:[%s1 + $0x8] sm:$0xf]
  %v21 = vld [vmem:[%s1 + $0xc] sm:$0xf]
  %v22 = vld [vmem:[%s1 + $0x10] sm:$0xf]
  %v23 = vld [vmem:[%s1 + $0x14] sm:$0xf]
  %v24 = vld [vmem:[%s1 + $0x18] sm:$0xf]
  %v25 = vld [vmem:[%s1 + $0x1c] sm:$0xf]
  %v26 = vld [vmem:[%s1 + $0x20] sm:$0xf]
  %v27 = vld [vmem:[%s1 + $0x24] sm:$0xf]
  %v28 = vld [vmem:[%s1 + $0x28] sm:$0xf]
  %v29 = vld [vmem:[%s1 + $0x2c] sm:$0xf]
  %v30 = vld [vmem:[%s1 + $0x30] sm:$0xf]
  %v31 = vld [vmem:[%s1 + $0x34] sm:$0xf]
  %v32 = vld [vmem:[%s1 + $0x38] sm:$0xf]
  %v33 = vld [vmem:[%s1 + $0x3c] sm:$0xf]
  %v34 = vld [vmem:[%s2] sm:$0xf]
  %v35 = vld [vmem:[%s2 + $0x4] sm:$0xf]
  %v36 = vld [vmem:[%s2 + $0x8] sm:$0xf]
  %v37 = vld [vmem:[%s2 + $0xc] sm:$0xf]
  %v38 = vld [vmem:[%s2 + $0x10] sm:$0xf]
  %v39 = vld [vmem:[%s2 + $0x14] sm:$0xf]
  %v40 = vld [vmem:[%s2 + $0x18] sm:$0xf]
  %v41 = vld [vmem:[%s2 + $0x1c] sm:$0xf]
  %v42 = vld [vmem:[%s2 + $0x20] sm:$0xf]
  %v43 = vld [vmem:[%s2 + $0x24] sm:$0xf]
  %v44 = vld [vmem:[%s2 + $0x28] sm:$0xf]
  %v45 = vld [vmem:[%s2 + $0x2c] sm:$0xf]
  %v46 = vld [vmem:[%s2 + $0x30] sm:$0xf]
  %v47 = vld [vmem:[%s2 + $0x34] sm:$0xf]
  %v48 = vld [vmem:[%s2 + $0x38] sm:$0xf]
  %v49 = vld [vmem:[%s2 + $0x3c] sm:$0xf]
  %v66 = vunpack.c.l.b16 %v18
  %v67 = vunpack.c.l.b16 %v19
  %v68 = vunpack.c.l.b16 %v20
  %v69 = vunpack.c.l.b16 %v21
  %v70 = vunpack.c.l.b16 %v22
  %v71 = vunpack.c.l.b16 %v23
  %v72 = vunpack.c.l.b16 %v24
  %v73 = vunpack.c.l.b16 %v25
  %v74 = vunpack.c.l.b16 %v26
  %v75 = vunpack.c.l.b16 %v27
  %v76 = vunpack.c.l.b16 %v28
  %v77 = vunpack.c.l.b16 %v29
  %v78 = vunpack.c.l.b16 %v30
  %v79 = vunpack.c.l.b16 %v31
  %v80 = vunpack.c.l.b16 %v32
  %v81 = vunpack.c.l.b16 %v33
  %v82 = vpack.c.b16 %v67, %v66
  %v83 = vpack.c.b16 %v69, %v68
  %v84 = vpack.c.b16 %v71, %v70
  %v85 = vpack.c.b16 %v73, %v72
  %v86 = vpack.c.b16 %v75, %v74
  %v87 = vpack.c.b16 %v77, %v76
  %v88 = vpack.c.b16 %v79, %v78
  %v89 = vpack.c.b16 %v81, %v80
  %v114 = vunpack.c.l.b16 %v34
  %v115 = vunpack.c.l.b16 %v35
  %v116 = vunpack.c.l.b16 %v36
  %v117 = vunpack.c.l.b16 %v37
  %v118 = vunpack.c.l.b16 %v38
  %v119 = vunpack.c.l.b16 %v39
  %v120 = vunpack.c.l.b16 %v40
  %v121 = vunpack.c.l.b16 %v41
  %v122 = vunpack.c.l.b16 %v42
  %v123 = vunpack.c.l.b16 %v43
  %v124 = vunpack.c.l.b16 %v44
  %v125 = vunpack.c.l.b16 %v45
  %v126 = vunpack.c.l.b16 %v46
  %v127 = vunpack.c.l.b16 %v47
  %v128 = vunpack.c.l.b16 %v48
  %v129 = vunpack.c.l.b16 %v49
  %v130 = vpack.c.b16 %v115, %v114
  %v131 = vpack.c.b16 %v117, %v116
  %v132 = vpack.c.b16 %v119, %v118
  %v133 = vpack.c.b16 %v121, %v120
  %v134 = vpack.c.b16 %v123, %v122
  %v135 = vpack.c.b16 %v125, %v124
  %v136 = vpack.c.b16 %v127, %v126
  %v137 = vpack.c.b16 %v129, %v128
  %146 = vmatprep.subr.bf16.mxu0 0
  %147 = vmatpush1.bf16.msra.mxu0 %v137
  %148 = vmatprep.subr.bf16.mxu0 0
  %149 = vmatpush1.bf16.msra.mxu0 %v136
  %150 = vmatprep.subr.bf16.mxu0 0
  %151 = vmatpush1.bf16.msra.mxu0 %v135
  %152 = vmatprep.subr.bf16.mxu0 0
  %153 = vmatpush1.bf16.msra.mxu0 %v134
  %154 = vmatprep.subr.bf16.mxu0 0
  %155 = vmatpush1.bf16.msra.mxu0 %v133
  %156 = vmatprep.subr.bf16.mxu0 0
  %157 = vmatpush1.bf16.msra.mxu0 %v132
  %158 = vmatprep.subr.bf16.mxu0 0
  %159 = vmatpush1.bf16.msra.mxu0 %v131
  %160 = vmatprep.subr.bf16.mxu0 0
  %161 = vmatpush1.bf16.msra.mxu0 %v130
  %162 = vmatprep.subr.bf16.mxu0 0
  %163 = vmatpush2.bf16.msra.mxu0 0
  %164 = vmatprep.subr.bf16.mxu0 0
  %165 = vmatpush2.bf16.msra.mxu0 0
  %166 = vmatprep.subr.bf16.mxu0 0
  %167 = vmatpush2.bf16.msra.mxu0 0
  %168 = vmatprep.subr.bf16.mxu0 0
  %169 = vmatpush2.bf16.msra.mxu0 0
  %170 = vmatprep.subr.bf16.mxu0 0
  %171 = vmatpush2.bf16.msra.mxu0 0
  %172 = vmatprep.subr.bf16.mxu0 0
  %173 = vmatpush2.bf16.msra.mxu0 0
  %174 = vmatprep.subr.bf16.mxu0 0
  %175 = vmatpush2.bf16.msra.mxu0 0
  %176 = vmatprep.subr.bf16.mxu0 0
  %177 = vmatpush2.bf16.msra.mxu0 0
  %178 = vmatprep.mubr.bf16.mxu0 0
  %179 = vmatmul.mubr.bf16.gmra.mxu0 %v82
  %v180 = vpop.f32.mrf.mxu0
  %v181 = vadd.f32 0.0, %v180
  %v182 = vpop.f32.mrf.mxu0
  %v183 = vpop.f32.mrf.mxu0
  %v184 = vadd.f32 0.0, %v183
  %v185 = vpop.f32.mrf.mxu0
  %186 = vmatprep.mubr.bf16.mxu0 0
  %187 = vmatmul.mubr.bf16.gmra.mxu0 %v83
  %v188 = vpop.f32.mrf.mxu0
  %v189 = vadd.f32 0.0, %v188
  %v190 = vpop.f32.mrf.mxu0
  %v191 = vpop.f32.mrf.mxu0
  %v192 = vadd.f32 0.0, %v191
  %v193 = vpop.f32.mrf.mxu0
  %194 = vmatprep.mubr.bf16.mxu0 0
  %195 = vmatmul.mubr.bf16.gmra.mxu0 %v84
  %v196 = vpop.f32.mrf.mxu0
  %v197 = vadd.f32 0.0, %v196
  %v198 = vpop.f32.mrf.mxu0
  %v199 = vpop.f32.mrf.mxu0
  %v200 = vadd.f32 0.0, %v199
  %v201 = vpop.f32.mrf.mxu0
  %202 = vmatprep.mubr.bf16.mxu0 0
  %203 = vmatmul.mubr.bf16.gmra.mxu0 %v85
  %v204 = vpop.f32.mrf.mxu0
  %v205 = vadd.f32 0.0, %v204
  %v206 = vpop.f32.mrf.mxu0
  %v207 = vpop.f32.mrf.mxu0
  %v208 = vadd.f32 0.0, %v207
  %v209 = vpop.f32.mrf.mxu0
  %210 = vmatprep.mubr.bf16.mxu0 0
  %211 = vmatmul.mubr.bf16.gmra.mxu0 %v86
  %v212 = vpop.f32.mrf.mxu0
  %v213 = vadd.f32 0.0, %v212
  %v214 = vpop.f32.mrf.mxu0
  %v215 = vpop.f32.mrf.mxu0
  %v216 = vadd.f32 0.0, %v215
  %v217 = vpop.f32.mrf.mxu0
  %218 = vmatprep.mubr.bf16.mxu0 0
  %219 = vmatmul.mubr.bf16.gmra.mxu0 %v87
  %v220 = vpop.f32.mrf.mxu0
  %v221 = vadd.f32 0.0, %v220
  %v222 = vpop.f32.mrf.mxu0
  %v223 = vpop.f32.mrf.mxu0
  %v224 = vadd.f32 0.0, %v223
  %v225 = vpop.f32.mrf.mxu0
  %226 = vmatprep.mubr.bf16.mxu0 0
  %227 = vmatmul.mubr.bf16.gmra.mxu0 %v88
  %v228 = vpop.f32.mrf.mxu0
  %v229 = vadd.f32 0.0, %v228
  %v230 = vpop.f32.mrf.mxu0
  %v231 = vpop.f32.mrf.mxu0
  %v232 = vadd.f32 0.0, %v231
  %v233 = vpop.f32.mrf.mxu0
  %234 = vmatprep.mubr.bf16.mxu0 0
  %235 = vmatmul.mubr.bf16.gmra.mxu0 %v89
  %v236 = vpop.f32.mrf.mxu0
  %v237 = vadd.f32 0.0, %v236
  %v238 = vpop.f32.mrf.mxu0
  %v239 = vpop.f32.mrf.mxu0
  %v240 = vadd.f32 0.0, %v239
  %v241 = vpop.f32.mrf.mxu0
  %242 = vdwg.mxu0
  %v243 = vpack.c.bf16 %v184, %v181
  %v244 = vpack.c.bf16 %v192, %v189
  %v245 = vpack.c.bf16 %v200, %v197
  %v246 = vpack.c.bf16 %v208, %v205
  %v247 = vpack.c.bf16 %v216, %v213
  %v248 = vpack.c.bf16 %v224, %v221
  %v249 = vpack.c.bf16 %v232, %v229
  %v250 = vpack.c.bf16 %v240, %v237
  %v259 = vunpack.c.l.b16 %v243
  %v260 = vunpack.c.h.b16 %v243
  %v261 = vunpack.c.l.b16 %v244
  %v262 = vunpack.c.h.b16 %v244
  %v263 = vunpack.c.l.b16 %v245
  %v264 = vunpack.c.h.b16 %v245
  %v265 = vunpack.c.l.b16 %v246
  %v266 = vunpack.c.h.b16 %v246
  %v267 = vunpack.c.l.b16 %v247
  %v268 = vunpack.c.h.b16 %v247
  %v269 = vunpack.c.l.b16 %v248
  %v270 = vunpack.c.h.b16 %v248
  %v271 = vunpack.c.l.b16 %v249
  %v272 = vunpack.c.h.b16 %v249
  %v273 = vunpack.c.l.b16 %v250
  %v274 = vunpack.c.h.b16 %v250
  %v275 = vpack.c.b16 %v259, %v259
  %v276 = vpack.c.b16 %v260, %v260
  %v277 = vpack.c.b16 %v261, %v261
  %v278 = vpack.c.b16 %v262, %v262
  %v279 = vpack.c.b16 %v263, %v263
  %v280 = vpack.c.b16 %v264, %v264
  %v281 = vpack.c.b16 %v265, %v265
  %v282 = vpack.c.b16 %v266, %v266
  %v283 = vpack.c.b16 %v267, %v267
  %v284 = vpack.c.b16 %v268, %v268
  %v285 = vpack.c.b16 %v269, %v269
  %v286 = vpack.c.b16 %v270, %v270
  %v287 = vpack.c.b16 %v271, %v271
  %v288 = vpack.c.b16 %v272, %v272
  %v289 = vpack.c.b16 %v273, %v273
  %v290 = vpack.c.b16 %v274, %v274
  %307 = vst [vmem:[%s3] sm:$0xf] %v275
  %308 = vst [vmem:[%s3 + $0x4] sm:$0xf] %v276
  %309 = vst [vmem:[%s3 + $0x8] sm:$0xf] %v277
  %310 = vst [vmem:[%s3 + $0xc] sm:$0xf] %v278
  %311 = vst [vmem:[%s3 + $0x10] sm:$0xf] %v279
  %312 = vst [vmem:[%s3 + $0x14] sm:$0xf] %v280
  %313 = vst [vmem:[%s3 + $0x18] sm:$0xf] %v281
  %314 = vst [vmem:[%s3 + $0x1c] sm:$0xf] %v282
  %315 = vst [vmem:[%s3 + $0x20] sm:$0xf] %v283
  %316 = vst [vmem:[%s3 + $0x24] sm:$0xf] %v284
  %317 = vst [vmem:[%s3 + $0x28] sm:$0xf] %v285
  %318 = vst [vmem:[%s3 + $0x2c] sm:$0xf] %v286
  %319 = vst [vmem:[%s3 + $0x30] sm:$0xf] %v287
  %320 = vst [vmem:[%s3 + $0x34] sm:$0xf] %v288
  %321 = vst [vmem:[%s3 + $0x38] sm:$0xf] %v289
  %322 = vst [vmem:[%s3 + $0x3c] sm:$0xf] %v290
  %v323 = vld [vmem:[%s0] sm:$0xf]
  %324 = vmatprep.subr.bf16.mxu0 0
  %325 = vmatpush1.bf16.msra.mxu0 %v250
  %326 = vmatprep.subr.bf16.mxu0 0
  %327 = vmatpush1.bf16.msra.mxu0 %v249
  %328 = vmatprep.subr.bf16.mxu0 0
  %329 = vmatpush1.bf16.msra.mxu0 %v248
  %330 = vmatprep.subr.bf16.mxu0 0
  %331 = vmatpush1.bf16.msra.mxu0 %v247
  %332 = vmatprep.subr.bf16.mxu0 0
  %333 = vmatpush1.bf16.msra.mxu0 %v246
  %334 = vmatprep.subr.bf16.mxu0 0
  %335 = vmatpush1.bf16.msra.mxu0 %v245
  %336 = vmatprep.subr.bf16.mxu0 0
  %337 = vmatpush1.bf16.msra.mxu0 %v244
  %338 = vmatprep.subr.bf16.mxu0 0
  %339 = vmatpush1.bf16.msra.mxu0 %v243
  %340 = vmatprep.subr.bf16.mxu0 0
  %341 = vmatpush2.bf16.msra.mxu0 0
  %342 = vmatprep.subr.bf16.mxu0 0
  %343 = vmatpush2.bf16.msra.mxu0 0
  %344 = vmatprep.subr.bf16.mxu0 0
  %345 = vmatpush2.bf16.msra.mxu0 0
  %346 = vmatprep.subr.bf16.mxu0 0
  %347 = vmatpush2.bf16.msra.mxu0 0
  %348 = vmatprep.subr.bf16.mxu0 0
  %349 = vmatpush2.bf16.msra.mxu0 0
  %350 = vmatprep.subr.bf16.mxu0 0
  %351 = vmatpush2.bf16.msra.mxu0 0
  %352 = vmatprep.subr.bf16.mxu0 0
  %353 = vmatpush2.bf16.msra.mxu0 0
  %354 = vmatprep.subr.bf16.mxu0 0
  %355 = vmatpush2.bf16.msra.mxu0 0
  %356 = vmatprep.mubr.bf16.mxu0 0
  %357 = vmatmul.mubr.bf16.gmra.mxu0 %v323
  %v358 = vpop.f32.mrf.mxu0
  %v359 = vadd.f32 0.0, %v358
  %v360 = vpop.f32.mrf.mxu0
  %v361 = vpop.f32.mrf.mxu0
  %v362 = vpop.f32.mrf.mxu0
  %363 = vdwg.mxu0
  %364 = vst [vmem:[%s4] sm:$0xff] %v359
  %v365 = vmul.bf16 %v243, %v243
  %v366 = vmul.bf16 %v244, %v244
  %v367 = vmul.bf16 %v245, %v245
  %v368 = vmul.bf16 %v246, %v246
  %v369 = vmul.bf16 %v247, %v247
  %v370 = vmul.bf16 %v248, %v248
  %v371 = vmul.bf16 %v249, %v249
  %v372 = vmul.bf16 %v250, %v250
  %373 = vmatprep.subr.bf16.mxu0 0
  %374 = vmatpush1.bf16.msra.mxu0 %v372
  %375 = vmatprep.subr.bf16.mxu0 0
  %376 = vmatpush1.bf16.msra.mxu0 %v371
  %377 = vmatprep.subr.bf16.mxu0 0
  %378 = vmatpush1.bf16.msra.mxu0 %v370
  %379 = vmatprep.subr.bf16.mxu0 0
  %380 = vmatpush1.bf16.msra.mxu0 %v369
  %381 = vmatprep.subr.bf16.mxu0 0
  %382 = vmatpush1.bf16.msra.mxu0 %v368
  %383 = vmatprep.subr.bf16.mxu0 0
  %384 = vmatpush1.bf16.msra.mxu0 %v367
  %385 = vmatprep.subr.bf16.mxu0 0
  %386 = vmatpush1.bf16.msra.mxu0 %v366
  %387 = vmatprep.subr.bf16.mxu0 0
  %388 = vmatpush1.bf16.msra.mxu0 %v365
  %389 = vmatprep.subr.bf16.mxu0 0
  %390 = vmatpush2.bf16.msra.mxu0 0
  %391 = vmatprep.subr.bf16.mxu0 0
  %392 = vmatpush2.bf16.msra.mxu0 0
  %393 = vmatprep.subr.bf16.mxu0 0
  %394 = vmatpush2.bf16.msra.mxu0 0
  %395 = vmatprep.subr.bf16.mxu0 0
  %396 = vmatpush2.bf16.msra.mxu0 0
  %397 = vmatprep.subr.bf16.mxu0 0
  %398 = vmatpush2.bf16.msra.mxu0 0
  %399 = vmatprep.subr.bf16.mxu0 0
  %400 = vmatpush2.bf16.msra.mxu0 0
  %401 = vmatprep.subr.bf16.mxu0 0
  %402 = vmatpush2.bf16.msra.mxu0 0
  %403 = vmatprep.subr.bf16.mxu0 0
  %404 = vmatpush2.bf16.msra.mxu0 0
  %405 = vmatprep.mubr.bf16.mxu0 0
  %406 = vmatmul.mubr.bf16.gmra.mxu0 %v323
  %v407 = vpop.f32.mrf.mxu0
  %v408 = vadd.f32 0.0, %v407
  %v409 = vpop.f32.mrf.mxu0
  %v410 = vpop.f32.mrf.mxu0
  %v411 = vpop.f32.mrf.mxu0
  %412 = vdwg.mxu0
  %413 = vst [vmem:[%s5] sm:$0xff] %v408
  // Predicated region
  $region14: #{_lambda_.3} parent=0 // pred_check
    _
  $region15: #{_lambda_.3} parent=0 // pred_check_branch
    %415 = sbr.rel (0) target = $region17
  $region16: #{_lambda_.3} parent=0 // pred_region
    _
  $region17: #{_lambda_.3} parent=0 // pred_fallthru
    _
  // Predicated region
  $region18: #{_lambda_.3} parent=0 // pred_check
    _
  $region19: #{_lambda_.3} parent=0 // pred_check_branch
    %417 = sbr.rel (0) target = $region21
  $region20: #{_lambda_.3} parent=0 // pred_region
    _
  $region21: #{_lambda_.3} parent=0 // pred_fallthru
    _
  // Predicated region
  $region22: #{_lambda_.3} parent=0 // pred_check
    _
  $region23: #{_lambda_.3} parent=0 // pred_check_branch
    %419 = sbr.rel (0) target = $region25
  $region24: #{_lambda_.3} parent=0 // pred_region
    _
  $region25: #{_lambda_.3} parent=0 // pred_fallthru
    _
  // Predicated region
  $region26: #{_lambda_.3} parent=0 // pred_check
    _
  $region27: #{_lambda_.3} parent=0 // pred_check_branch
    %421 = sbr.rel (0) target = $region29
  $region28: #{_lambda_.3} parent=0 // pred_region
    _
  $region29: #{_lambda_.3} parent=0 // pred_fallthru
    _
  // Predicated region
  $region30: #{_lambda_.3} parent=0 // pred_check
    _
  $region31: #{_lambda_.3} parent=0 // pred_check_branch
    %423 = sbr.rel (0) target = $region33
  $region32: #{_lambda_.3} parent=0 // pred_region
    _
  $region33: #{_lambda_.3} parent=0 // pred_fallthru
    _
  // Predicated region
  $region34: #{_lambda_.3} parent=0 // pred_check
    _
  $region35: #{_lambda_.3} parent=0 // pred_check_branch
    %425 = sbr.rel (0) target = $region37
  $region36: #{_lambda_.3} parent=0 // pred_region
    _
  $region37: #{_lambda_.3} parent=0 // pred_fallthru
    _

// kernel: _lambda_.5
$region0: #{_lambda_.5}
  #allocation0 [shape = 'u32[]', space=smem, size = 0x4, offset = 0x4, fixed_abs, tag = 'smem constant byte address 0x4 - core index']
  #allocation1 [shape = 'u32[144,128]{1,0:T(1,128)}', space=vmem, size = 0x12000, scoped, tag = 'internal scratch']
  %s0 = inlined_call_operand.vmem [shape: bf16[128,128], index: 0, kind: input, shape index: {}]
  %s1 = inlined_call_operand.vmem [shape: f32[1,128], index: 1, kind: input, shape index: {}]
  %s2 = inlined_call_operand.vmem [shape: f32[1,128], index: 2, kind: input, shape index: {}]
  %s3 = inlined_call_operand.vmem [shape: bf16[128,128], index: 3, kind: input, shape index: {}]
  %s4 = inlined_call_operand.vmem [shape: f32[1,128], index: 4, kind: input, shape index: {}]
  %s5 = inlined_call_operand.vmem [shape: f32[128,128], index: 5, kind: output, shape index: {}]
  %s6 = sld [smem:[#allocation0]]
  $region30: #{_lambda_.5} parent=0
    _
  %s8 = ssub.s32 1, %s6
  %s9 = scalar_select 0, %s8, %s6
  // Predicated region
  $region2: #{_lambda_.5} parent=0 // pred_check
    _
  $region3: #{_lambda_.5} parent=0 // pred_check_branch
    %11 = sbr.rel (0) target = $region5
  $region4: #{_lambda_.5} parent=0 // pred_region
    _
  $region5: #{_lambda_.5} parent=0 // pred_fallthru
    _
  // Predicated region
  $region6: #{_lambda_.5} parent=0 // pred_check
    _
  $region7: #{_lambda_.5} parent=0 // pred_check_branch
    %13 = sbr.rel (0) target = $region9
  $region8: #{_lambda_.5} parent=0 // pred_region
    _
  $region9: #{_lambda_.5} parent=0 // pred_fallthru
    _
  // Predicated region
  $region10: #{_lambda_.5} parent=0 // pred_check
    _
  $region11: #{_lambda_.5} parent=0 // pred_check_branch
    %15 = sbr.rel (0) target = $region13
  $region12: #{_lambda_.5} parent=0 // pred_region
    _
  $region13: #{_lambda_.5} parent=0 // pred_fallthru
    _
  // Predicated region
  $region14: #{_lambda_.5} parent=0 // pred_check
    _
  $region15: #{_lambda_.5} parent=0 // pred_check_branch
    %17 = sbr.rel (0) target = $region17
  $region16: #{_lambda_.5} parent=0 // pred_region
    _
  $region17: #{_lambda_.5} parent=0 // pred_fallthru
    _
  // Predicated region
  $region18: #{_lambda_.5} parent=0 // pred_check
    _
  $region19: #{_lambda_.5} parent=0 // pred_check_branch
    %19 = sbr.rel (0) target = $region21
  $region20: #{_lambda_.5} parent=0 // pred_region
    _
  $region21: #{_lambda_.5} parent=0 // pred_fallthru
    _
  %v22 = vld [vmem:[%s0] sm:$0xf]
  %v23 = vld [vmem:[%s0 + $0x4] sm:$0xf]
  %v24 = vld [vmem:[%s0 + $0x8] sm:$0xf]
  %v25 = vld [vmem:[%s0 + $0xc] sm:$0xf]
  %v26 = vld [vmem:[%s0 + $0x10] sm:$0xf]
  %v27 = vld [vmem:[%s0 + $0x14] sm:$0xf]
  %v28 = vld [vmem:[%s0 + $0x18] sm:$0xf]
  %v29 = vld [vmem:[%s0 + $0x1c] sm:$0xf]
  %v30 = vld [vmem:[%s0 + $0x20] sm:$0xf]
  %v31 = vld [vmem:[%s0 + $0x24] sm:$0xf]
  %v32 = vld [vmem:[%s0 + $0x28] sm:$0xf]
  %v33 = vld [vmem:[%s0 + $0x2c] sm:$0xf]
  %v34 = vld [vmem:[%s0 + $0x30] sm:$0xf]
  %v35 = vld [vmem:[%s0 + $0x34] sm:$0xf]
  %v36 = vld [vmem:[%s0 + $0x38] sm:$0xf]
  %v37 = vld [vmem:[%s0 + $0x3c] sm:$0xf]
  %v38 = vld [vmem:[%s1] sm:$0x1]
  %v39 = vpack.c.bf16 %v38, %v38
  %v41 = vpack.i.b16 %v39, %v39
  %v43 = vlaneseq
  %v44 = vshrl.u32 %v43, 7
  %v45 = vsub.s32 0, %v44
  %v46 = vrot.slane %v41, %v45
  %v48 = vunpack.c.l.b16 %v46
  %v49 = vpack.c.b16 %v48, %v48
  %v51 = vmul.bf16 %v22, %v49
  %v52 = vmul.bf16 %v23, %v49
  %v53 = vmul.bf16 %v24, %v49
  %v54 = vmul.bf16 %v25, %v49
  %v55 = vmul.bf16 %v26, %v49
  %v56 = vmul.bf16 %v27, %v49
  %v57 = vmul.bf16 %v28, %v49
  %v58 = vmul.bf16 %v29, %v49
  %v59 = vmul.bf16 %v30, %v49
  %v60 = vmul.bf16 %v31, %v49
  %v61 = vmul.bf16 %v32, %v49
  %v62 = vmul.bf16 %v33, %v49
  %v63 = vmul.bf16 %v34, %v49
  %v64 = vmul.bf16 %v35, %v49
  %v65 = vmul.bf16 %v36, %v49
  %v66 = vmul.bf16 %v37, %v49
  %v67 = vld [vmem:[%s2] sm:$0x1]
  %v68 = vpack.c.bf16 %v67, %v67
  %v70 = vpack.i.b16 %v68, %v68
  %v72 = vlaneseq
  %v73 = vshrl.u32 %v72, 7
  %v74 = vsub.s32 0, %v73
  %v75 = vrot.slane %v70, %v74
  %v77 = vunpack.c.l.b16 %v75
  %v78 = vpack.c.b16 %v77, %v77
  %v80 = vadd.bf16 %v51, %v78
  %v81 = vadd.bf16 %v52, %v78
  %v82 = vadd.bf16 %v53, %v78
  %v83 = vadd.bf16 %v54, %v78
  %v84 = vadd.bf16 %v55, %v78
  %v85 = vadd.bf16 %v56, %v78
  %v86 = vadd.bf16 %v57, %v78
  %v87 = vadd.bf16 %v58, %v78
  %v88 = vadd.bf16 %v59, %v78
  %v89 = vadd.bf16 %v60, %v78
  %v90 = vadd.bf16 %v61, %v78
  %v91 = vadd.bf16 %v62, %v78
  %v92 = vadd.bf16 %v63, %v78
  %v93 = vadd.bf16 %v64, %v78
  %v94 = vadd.bf16 %v65, %v78
  %v95 = vadd.bf16 %v66, %v78
  %v96 = vmul.bf16 %v80, 1009007652
  %v97 = vmul.bf16 %v81, 1009007652
  %v98 = vmul.bf16 %v82, 1009007652
  %v99 = vmul.bf16 %v83, 1009007652
  %v100 = vmul.bf16 %v84, 1009007652
  %v101 = vmul.bf16 %v85, 1009007652
  %v102 = vmul.bf16 %v86, 1009007652
  %v103 = vmul.bf16 %v87, 1009007652
  %v104 = vmul.bf16 %v88, 1009007652
  %v105 = vmul.bf16 %v89, 1009007652
  %v106 = vmul.bf16 %v90, 1009007652
  %v107 = vmul.bf16 %v91, 1009007652
  %v108 = vmul.bf16 %v92, 1009007652
  %v109 = vmul.bf16 %v93, 1009007652
  %v110 = vmul.bf16 %v94, 1009007652
  %v111 = vmul.bf16 %v95, 1009007652
  %v112 = vmax.bf16 %v80, %v96
  %v113 = vmax.bf16 %v81, %v97
  %v114 = vmax.bf16 %v82, %v98
  %v115 = vmax.bf16 %v83, %v99
  %v116 = vmax.bf16 %v84, %v100
  %v117 = vmax.bf16 %v85, %v101
  %v118 = vmax.bf16 %v86, %v102
  %v119 = vmax.bf16 %v87, %v103
  %v120 = vmax.bf16 %v88, %v104
  %v121 = vmax.bf16 %v89, %v105
  %v122 = vmax.bf16 %v90, %v106
  %v123 = vmax.bf16 %v91, %v107
  %v124 = vmax.bf16 %v92, %v108
  %v125 = vmax.bf16 %v93, %v109
  %v126 = vmax.bf16 %v94, %v110
  %v127 = vmax.bf16 %v95, %v111
  %v128 = vld [vmem:[%s3] sm:$0xf]
  %v129 = vld [vmem:[%s3 + $0x4] sm:$0xf]
  %v130 = vld [vmem:[%s3 + $0x8] sm:$0xf]
  %v131 = vld [vmem:[%s3 + $0xc] sm:$0xf]
  %v132 = vld [vmem:[%s3 + $0x10] sm:$0xf]
  %v133 = vld [vmem:[%s3 + $0x14] sm:$0xf]
  %v134 = vld [vmem:[%s3 + $0x18] sm:$0xf]
  %v135 = vld [vmem:[%s3 + $0x1c] sm:$0xf]
  %v136 = vld [vmem:[%s3 + $0x20] sm:$0xf]
  %v137 = vld [vmem:[%s3 + $0x24] sm:$0xf]
  %v138 = vld [vmem:[%s3 + $0x28] sm:$0xf]
  %v139 = vld [vmem:[%s3 + $0x2c] sm:$0xf]
  %v140 = vld [vmem:[%s3 + $0x30] sm:$0xf]
  %v141 = vld [vmem:[%s3 + $0x34] sm:$0xf]
  %v142 = vld [vmem:[%s3 + $0x38] sm:$0xf]
  %v143 = vld [vmem:[%s3 + $0x3c] sm:$0xf]
  %v144 = vld [vmem:[%s4] sm:$0x1]
  %v146 = vlaneseq
  %v147 = vshrl.u32 %v146, 7
  %v148 = vsub.s32 0, %v147
  %v149 = vrot.slane %v144, %v148
  %v167 = vunpack.c.l.b16 %v112
  %v168 = vunpack.c.l.b16 %v113
  %v169 = vunpack.c.l.b16 %v114
  %v170 = vunpack.c.l.b16 %v115
  %v171 = vunpack.c.l.b16 %v116
  %v172 = vunpack.c.l.b16 %v117
  %v173 = vunpack.c.l.b16 %v118
  %v174 = vunpack.c.l.b16 %v119
  %v175 = vunpack.c.l.b16 %v120
  %v176 = vunpack.c.l.b16 %v121
  %v177 = vunpack.c.l.b16 %v122
  %v178 = vunpack.c.l.b16 %v123
  %v179 = vunpack.c.l.b16 %v124
  %v180 = vunpack.c.l.b16 %v125
  %v181 = vunpack.c.l.b16 %v126
  %v182 = vunpack.c.l.b16 %v127
  %v183 = vpack.c.b16 %v168, %v167
  %v184 = vpack.c.b16 %v170, %v169
  %v185 = vpack.c.b16 %v172, %v171
  %v186 = vpack.c.b16 %v174, %v173
  %v187 = vpack.c.b16 %v176, %v175
  %v188 = vpack.c.b16 %v178, %v177
  %v189 = vpack.c.b16 %v180, %v179
  %v190 = vpack.c.b16 %v182, %v181
  %v215 = vunpack.c.l.b16 %v128
  %v216 = vunpack.c.l.b16 %v129
  %v217 = vunpack.c.l.b16 %v130
  %v218 = vunpack.c.l.b16 %v131
  %v219 = vunpack.c.l.b16 %v132
  %v220 = vunpack.c.l.b16 %v133
  %v221 = vunpack.c.l.b16 %v134
  %v222 = vunpack.c.l.b16 %v135
  %v223 = vunpack.c.l.b16 %v136
  %v224 = vunpack.c.l.b16 %v137
  %v225 = vunpack.c.l.b16 %v138
  %v226 = vunpack.c.l.b16 %v139
  %v227 = vunpack.c.l.b16 %v140
  %v228 = vunpack.c.l.b16 %v141
  %v229 = vunpack.c.l.b16 %v142
  %v230 = vunpack.c.l.b16 %v143
  %v231 = vpack.c.b16 %v216, %v215
  %v232 = vpack.c.b16 %v218, %v217
  %v233 = vpack.c.b16 %v220, %v219
  %v234 = vpack.c.b16 %v222, %v221
  %v235 = vpack.c.b16 %v224, %v223
  %v236 = vpack.c.b16 %v226, %v225
  %v237 = vpack.c.b16 %v228, %v227
  %v238 = vpack.c.b16 %v230, %v229
  %247 = vmatprep.subr.bf16.mxu0 0
  %248 = vmatpush1.bf16.msra.mxu0 %v238
  %249 = vmatprep.subr.bf16.mxu0 0
  %250 = vmatpush1.bf16.msra.mxu0 %v237
  %251 = vmatprep.subr.bf16.mxu0 0
  %252 = vmatpush1.bf16.msra.mxu0 %v236
  %253 = vmatprep.subr.bf16.mxu0 0
  %254 = vmatpush1.bf16.msra.mxu0 %v235
  %255 = vmatprep.subr.bf16.mxu0 0
  %256 = vmatpush1.bf16.msra.mxu0 %v234
  %257 = vmatprep.subr.bf16.mxu0 0
  %258 = vmatpush1.bf16.msra.mxu0 %v233
  %259 = vmatprep.subr.bf16.mxu0 0
  %260 = vmatpush1.bf16.msra.mxu0 %v232
  %261 = vmatprep.subr.bf16.mxu0 0
  %262 = vmatpush1.bf16.msra.mxu0 %v231
  %263 = vmatprep.subr.bf16.mxu0 0
  %264 = vmatpush2.bf16.msra.mxu0 0
  %265 = vmatprep.subr.bf16.mxu0 0
  %266 = vmatpush2.bf16.msra.mxu0 0
  %267 = vmatprep.subr.bf16.mxu0 0
  %268 = vmatpush2.bf16.msra.mxu0 0
  %269 = vmatprep.subr.bf16.mxu0 0
  %270 = vmatpush2.bf16.msra.mxu0 0
  %271 = vmatprep.subr.bf16.mxu0 0
  %272 = vmatpush2.bf16.msra.mxu0 0
  %273 = vmatprep.subr.bf16.mxu0 0
  %274 = vmatpush2.bf16.msra.mxu0 0
  %275 = vmatprep.subr.bf16.mxu0 0
  %276 = vmatpush2.bf16.msra.mxu0 0
  %277 = vmatprep.subr.bf16.mxu0 0
  %278 = vmatpush2.bf16.msra.mxu0 0
  %279 = vmatprep.mubr.bf16.mxu0 0
  %280 = vmatmul.mubr.bf16.gmra.mxu0 %v183
  %v281 = vpop.f32.mrf.mxu0
  %v282 = vadd.f32 %v149, %v281
  %v283 = vpop.f32.mrf.mxu0
  %v284 = vpop.f32.mrf.mxu0
  %v285 = vadd.f32 %v149, %v284
  %v286 = vpop.f32.mrf.mxu0
  %287 = vmatprep.mubr.bf16.mxu0 0
  %288 = vmatmul.mubr.bf16.gmra.mxu0 %v184
  %v289 = vpop.f32.mrf.mxu0
  %v290 = vadd.f32 %v149, %v289
  %v291 = vpop.f32.mrf.mxu0
  %v292 = vpop.f32.mrf.mxu0
  %v293 = vadd.f32 %v149, %v292
  %v294 = vpop.f32.mrf.mxu0
  %295 = vmatprep.mubr.bf16.mxu0 0
  %296 = vmatmul.mubr.bf16.gmra.mxu0 %v185
  %v297 = vpop.f32.mrf.mxu0
  %v298 = vadd.f32 %v149, %v297
  %v299 = vpop.f32.mrf.mxu0
  %v300 = vpop.f32.mrf.mxu0
  %v301 = vadd.f32 %v149, %v300
  %v302 = vpop.f32.mrf.mxu0
  %303 = vmatprep.mubr.bf16.mxu0 0
  %304 = vmatmul.mubr.bf16.gmra.mxu0 %v186
  %v305 = vpop.f32.mrf.mxu0
  %v306 = vadd.f32 %v149, %v305
  %v307 = vpop.f32.mrf.mxu0
  %v308 = vpop.f32.mrf.mxu0
  %v309 = vadd.f32 %v149, %v308
  %v310 = vpop.f32.mrf.mxu0
  %311 = vmatprep.mubr.bf16.mxu0 0
  %312 = vmatmul.mubr.bf16.gmra.mxu0 %v187
  %v313 = vpop.f32.mrf.mxu0
  %v314 = vadd.f32 %v149, %v313
  %v315 = vpop.f32.mrf.mxu0
  %v316 = vpop.f32.mrf.mxu0
  %v317 = vadd.f32 %v149, %v316
  %v318 = vpop.f32.mrf.mxu0
  %319 = vmatprep.mubr.bf16.mxu0 0
  %320 = vmatmul.mubr.bf16.gmra.mxu0 %v188
  %v321 = vpop.f32.mrf.mxu0
  %v322 = vadd.f32 %v149, %v321
  %v323 = vpop.f32.mrf.mxu0
  %v324 = vpop.f32.mrf.mxu0
  %v325 = vadd.f32 %v149, %v324
  %v326 = vpop.f32.mrf.mxu0
  %327 = vmatprep.mubr.bf16.mxu0 0
  %328 = vmatmul.mubr.bf16.gmra.mxu0 %v189
  %v329 = vpop.f32.mrf.mxu0
  %v330 = vadd.f32 %v149, %v329
  %v331 = vpop.f32.mrf.mxu0
  %v332 = vpop.f32.mrf.mxu0
  %v333 = vadd.f32 %v149, %v332
  %v334 = vpop.f32.mrf.mxu0
  %335 = vmatprep.mubr.bf16.mxu0 0
  %336 = vmatmul.mubr.bf16.gmra.mxu0 %v190
  %v337 = vpop.f32.mrf.mxu0
  %v338 = vadd.f32 %v149, %v337
  %v339 = vpop.f32.mrf.mxu0
  %v340 = vpop.f32.mrf.mxu0
  %v341 = vadd.f32 %v149, %v340
  %v342 = vpop.f32.mrf.mxu0
  %343 = vdwg.mxu0
  %344 = vst [vmem:[%s5] sm:$0xff] %v282
  %345 = vst [vmem:[%s5 + $0x8] sm:$0xff] %v285
  %346 = vst [vmem:[%s5 + $0x10] sm:$0xff] %v290
  %347 = vst [vmem:[%s5 + $0x18] sm:$0xff] %v293
  %348 = vst [vmem:[%s5 + $0x20] sm:$0xff] %v298
  %349 = vst [vmem:[%s5 + $0x28] sm:$0xff] %v301
  %350 = vst [vmem:[%s5 + $0x30] sm:$0xff] %v306
  %351 = vst [vmem:[%s5 + $0x38] sm:$0xff] %v309
  %352 = vst [vmem:[%s5 + $0x40] sm:$0xff] %v314
  %353 = vst [vmem:[%s5 + $0x48] sm:$0xff] %v317
  %354 = vst [vmem:[%s5 + $0x50] sm:$0xff] %v322
  %355 = vst [vmem:[%s5 + $0x58] sm:$0xff] %v325
  %356 = vst [vmem:[%s5 + $0x60] sm:$0xff] %v330
  %357 = vst [vmem:[%s5 + $0x68] sm:$0xff] %v333
  %358 = vst [vmem:[%s5 + $0x70] sm:$0xff] %v338
  %359 = vst [vmem:[%s5 + $0x78] sm:$0xff] %v341
  // Predicated region
  $region22: #{_lambda_.5} parent=0 // pred_check
    _
  $region23: #{_lambda_.5} parent=0 // pred_check_branch
    %361 = sbr.rel (0) target = $region25
  $region24: #{_lambda_.5} parent=0 // pred_region
    _
  $region25: #{_lambda_.5} parent=0 // pred_fallthru
    _
  // Predicated region
  $region26: #{_lambda_.5} parent=0 // pred_check
    _
  $region27: #{_lambda_.5} parent=0 // pred_check_branch
    %363 = sbr.rel (0) target = $region29
  $region28: #{_lambda_.5} parent=0 // pred_region
    _
  $region29: #{_lambda_.5} parent=0 // pred_fallthru
    _

</llo_original>
